<compile_context>
chip_gen: v5e
topology: v5e:2x2
jax: 0.10.0
libtpu: 0.0.40
codegen_flags: <defaults>
</compile_context>

<pallas_src>
import functools

import numpy as np
import jax
import jax.numpy as jnp
from jax.experimental import pallas as pl
from jax.experimental.pallas import tpu as pltpu


# ---------------------------------------------------------------------------
# Fused encoder kernel
# ---------------------------------------------------------------------------
def _mpn_fused_kernel(depth, max_k,
                      ct_ref, nk_ref,                          # scalar prefetch (SMEM)
                      fb_ref, s_ref, mab_ref,                  # gridded / streamed
                      fa_ref, r_ref,                           # resident
                      wi_t_ref, wh_t_ref, woa_t_ref, woh_t_ref, bo_ref,
                      out_ref,
                      inp_sc, msg_a, msg_b, agg_sc, amsg_sc):
    t = pl.program_id(0)              # 0=init, 1..depth-1=MP steps, depth=readout
    i = pl.program_id(1)              # bond row tile
    k = pl.program_id(2)              # nonzero column tile index within row tile
    nbt = pl.num_programs(1)
    tb = fb_ref.shape[0]
    row0 = pl.multiple_of(i * tb, tb)
    rows = pl.ds(row0, tb)
    in_mp = (t >= 1) & (t <= depth - 1)

    # zero the resident output block and the readout accumulator once
    @pl.when((t == 0) & (i == 0) & (k == 0))
    def _zero():
        out_ref[...] = jnp.zeros_like(out_ref)
        amsg_sc[...] = jnp.zeros_like(amsg_sc)

    # ---- phase 0: input = f_bonds @ W_i^T ; message_0 = relu(input) ----------
    @pl.when((t == 0) & (k == 0))
    def _init():
        inp = jnp.dot(fb_ref[...], wi_t_ref[...],
                      preferred_element_type=jnp.float32)
        inp_sc[rows, :] = inp
        msg_a[rows, :] = jnp.maximum(inp, 0.0).astype(msg_a.dtype)

    # ---- phases 1..depth-1: directed bond message passing --------------------
    #   new_msg = relu(input + (S @ msg) @ W_h^T)      (S folds gather - rev)
    # S is block-banded; only the nk[i] nonzero column tiles are visited.
    @pl.when(in_mp & (k == 0))
    def _zero_agg():
        agg_sc[...] = jnp.zeros_like(agg_sc)

    def _accum(src_ref):
        col = ct_ref[i * max_k + k]
        c0 = pl.multiple_of(col * tb, tb)
        agg_sc[...] += jnp.dot(s_ref[...], src_ref[pl.ds(c0, tb), :],
                               preferred_element_type=jnp.float32)

    def _finish(dst_ref):
        h = jnp.dot(agg_sc[...].astype(jnp.bfloat16), wh_t_ref[...],
                    preferred_element_type=jnp.float32)
        # dropout(p=0) is identity; residual add + relu kept in f32 (v5e VPU)
        dst_ref[rows, :] = jnp.maximum(inp_sc[rows, :] + h,
                                       0.0).astype(dst_ref.dtype)

    odd = (t % 2) == 1                # odd phases read msg_a, write msg_b
    valid_k = k < nk_ref[i]
    last_k = k == max_k - 1

    @pl.when(in_mp & odd & valid_k)
    def _():
        _accum(msg_a)

    @pl.when(in_mp & jnp.logical_not(odd) & valid_k)
    def _():
        _accum(msg_b)

    @pl.when(in_mp & odd & last_k)
    def _():
        _finish(msg_b)

    @pl.when(in_mp & jnp.logical_not(odd) & last_k)
    def _():
        _finish(msg_a)

    # ---- phase depth: readout -------------------------------------------------
    #   a_message = M_ab @ msg   (accumulated over streamed column tiles)
    #   atom_hidden = relu(f_atoms@Wo_a^T + a_msg@Wo_h^T + b_o)
    #   mol_vecs    = R @ atom_hidden   (rows of R carry 1/a_size -> 'mean')
    msg_fin = msg_a if (depth - 1) % 2 == 0 else msg_b   # static choice

    @pl.when((t == depth) & (k == 0))
    def _acc_readout():
        amsg_sc[...] += jnp.dot(mab_ref[...], msg_fin[rows, :],
                                preferred_element_type=jnp.float32)

    @pl.when((t == depth) & (i == nbt - 1) & last_k)
    def _readout():
        hid = (jnp.dot(fa_ref[...], woa_t_ref[...],
                       preferred_element_type=jnp.float32)
               + jnp.dot(amsg_sc[...].astype(jnp.bfloat16), woh_t_ref[...],
                         preferred_element_type=jnp.float32)
               + bo_ref[...])
        hid = jnp.maximum(hid, 0.0)
        out_ref[...] = jnp.dot(r_ref[...], hid,
                               preferred_element_type=jnp.float32)


# ---------------------------------------------------------------------------
# Wrapper: padding + pallas_call
# ---------------------------------------------------------------------------
def _round_up(n, m):
    return ((n + m - 1) // m) * m


def _pad2d(x, rows, cols):
    r, c = x.shape
    return jnp.pad(x, ((0, rows - r), (0, cols - c)))


def mpn_encoder_forward(graph, params, depth, *, lane=128):
    W_i, W_h, W_o, b_o = params
    H = W_i.shape[0]
    Fb = W_i.shape[1]
    Fa = W_o.shape[1] - H
    H_p = _round_up(H, lane)
    Fa_p = _round_up(Fa, lane)
    Fb_p = _round_up(Fb, lane)

    f_atoms, f_bonds = graph["f_atoms"], graph["f_bonds"]
    S, M_ab, R = graph["S"], graph["M_ab"], graph["R"]
    ct, nk, max_k = graph["col_tiles"], graph["n_col_tiles"], graph["max_k"]
    A_p, B_p, M_p = f_atoms.shape[0], f_bonds.shape[0], R.shape[0]
    tile_b = graph["tile_b"]
    nbt = B_p // tile_b

    # zero-padding of lane dims is exact (extra channels stay identically 0)
    fa_p = _pad2d(f_atoms, A_p, Fa_p)
    fb_p = _pad2d(f_bonds, B_p, Fb_p)
    # weight transposes done once; hot-path weights in bf16 (MXU input dtype)
    wi_t = _pad2d(W_i.T, Fb_p, H_p)                              # f32 (phase 0 only)
    wh_t = _pad2d(W_h.T, H_p, H_p).astype(jnp.bfloat16)
    woa_t = _pad2d(W_o[:, :Fa].T, Fa_p, H_p)                     # f32 (readout only)
    woh_t = _pad2d(W_o[:, Fa:].T, H_p, H_p).astype(jnp.bfloat16)
    bo = _pad2d(b_o.reshape(1, H), 1, H_p)

    grid = (depth + 1, nbt, max_k)

    # phase-aware index maps: pin blocks to 0 in phases where the operand is
    # not used, so the pipeline does not re-DMA it.
    def fb_map(t, i, k, ct_ref, nk_ref):
        return (jnp.where(t == 0, i, 0), 0)

    def s_map(t, i, k, ct_ref, nk_ref):
        in_mp = jnp.logical_and(t >= 1, t <= depth - 1)
        return (jnp.where(in_mp, i, 0),
                jnp.where(in_mp, ct_ref[i * max_k + k], 0))

    def mab_map(t, i, k, ct_ref, nk_ref):
        return (0, jnp.where(t == depth, i, 0))

    const = lambda t, i, k, ct_ref, nk_ref: (0, 0)

    # explicit VMEM budget: residents + double-buffered streamed tiles + scratch
    f32, bf16 = 4, 2
    resident = (A_p * Fa_p * f32 + M_p * A_p * f32 + Fb_p * H_p * f32
                + H_p * H_p * bf16 + Fa_p * H_p * f32 + H_p * H_p * bf16
                + H_p * f32 + M_p * H_p * f32)
    streamed = 2 * (tile_b * Fb_p * f32 + tile_b * tile_b * bf16
                    + A_p * tile_b * bf16)
    scratch = (B_p * H_p * f32 + 2 * B_p * H_p * bf16
               + tile_b * H_p * f32 + A_p * H_p * f32)
    vmem_limit = min(max(int(1.2 * (resident + streamed + scratch)) + (8 << 20),
                         32 << 20),
                     100 << 20)

    out = pl.pallas_call(
        functools.partial(_mpn_fused_kernel, depth, max_k),
        out_shape=jax.ShapeDtypeStruct((M_p, H_p), jnp.float32),
        grid_spec=pltpu.PrefetchScalarGridSpec(
            num_scalar_prefetch=2,
            grid=grid,
            in_specs=[
                pl.BlockSpec((tile_b, Fb_p), fb_map),      # f_bonds (row tiles)
                pl.BlockSpec((tile_b, tile_b), s_map),     # S (sparse block stream, bf16)
                pl.BlockSpec((A_p, tile_b), mab_map),      # M_ab (column tiles, bf16)
                pl.BlockSpec((A_p, Fa_p), const),          # f_atoms (resident)
                pl.BlockSpec((M_p, A_p), const),           # R (resident)
                pl.BlockSpec((Fb_p, H_p), const),          # W_i^T
                pl.BlockSpec((H_p, H_p), const),           # W_h^T (bf16)
                pl.BlockSpec((Fa_p, H_p), const),          # Wo_a^T
                pl.BlockSpec((H_p, H_p), const),           # Wo_h^T (bf16)
                pl.BlockSpec((1, H_p), const),             # b_o
            ],
            out_specs=pl.BlockSpec((M_p, H_p), const),
            scratch_shapes=[
                pltpu.VMEM((B_p, H_p), jnp.float32),       # input projection
                pltpu.VMEM((B_p, H_p), jnp.bfloat16),      # message (ping)
                pltpu.VMEM((B_p, H_p), jnp.bfloat16),      # message (pong)
                pltpu.VMEM((tile_b, H_p), jnp.float32),    # per-tile S@msg accumulator
                pltpu.VMEM((A_p, H_p), jnp.float32),       # a_message accumulator
            ],
        ),
        compiler_params=pltpu.CompilerParams(
            # all axes carry the recurrence / accumulators -> must stay sequential
            dimension_semantics=("arbitrary", "arbitrary", "arbitrary"),
            vmem_limit_bytes=vmem_limit),
    )(ct, nk, fb_p, S, M_ab, fa_p, R, wi_t, wh_t, woa_t, woh_t, bo)

    return out[:graph["n_mols"], :H]


def mpn_forward(prepared_batches, params, depth):
    # MPN.forward: encode each batch, concatenate encodings along dim=1.
    encodings = [mpn_encoder_forward(g, params, depth) for g in prepared_batches]
    if len(encodings) == 1:
        return encodings[0]
    return jnp.concatenate(encodings, axis=1)


# ---------------------------------------------------------------------------
# Graph construction (synthetic chains) + structural matrices
# ---------------------------------------------------------------------------
def build_batch(sizes, atom_fdim, bond_fdim, key):
    n_atoms = 1 + sum(sizes)                    # index 0 = padding atom
    a2b_list = [[] for _ in range(n_atoms)]     # incoming bonds per atom
    b2a, b2revb = [0], [0]                      # index 0 = padding bond
    a_scope, a_start, n_bonds = [], 1, 1
    for sz in sizes:
        a_scope.append((a_start, sz))
        for i in range(sz - 1):
            a1, a2 = a_start + i, a_start + i + 1
            b1, b2 = n_bonds, n_bonds + 1       # a1->a2, a2->a1
            b2a += [a1, a2]
            b2revb += [b2, b1]
            a2b_list[a2].append(b1)
            a2b_list[a1].append(b2)
            n_bonds += 2
        a_start += sz
    max_nb = max(1, max(len(x) for x in a2b_list))
    a2b = np.zeros((n_atoms, max_nb), np.int32)
    for a, lst in enumerate(a2b_list):
        a2b[a, :len(lst)] = lst
    b2a = np.asarray(b2a, np.int32)
    b2revb = np.asarray(b2revb, np.int32)

    k1, k2 = jax.random.split(key)
    f_atoms = jax.random.normal(k1, (n_atoms, atom_fdim), jnp.float32).at[0].set(0.0)
    f_bonds = jax.random.normal(k2, (n_bonds, bond_fdim), jnp.float32).at[0].set(0.0)

    return dict(f_atoms=f_atoms, f_bonds=f_bonds, a2b_list=a2b_list, a2b=a2b,
                b2a=b2a, b2revb=b2revb, a_scope=a_scope,
                n_atoms=n_atoms, n_bonds=n_bonds)


def prepare_graph(g, tile_b):
    """Dense structural matrices, padded and typed for the kernel.

    S folds the whole per-step gather/scatter:
        S[b, b'] = [b' incoming to b2a[b]] - [b' == b2revb[b]]   (entries >= 0)
    so one MP step is  msg <- relu(input + (S @ msg) @ W_h^T).
    Bonds are ordered per molecule, so S is block-banded; we record, per row
    tile, which column tiles are nonzero (scalar-prefetched by the kernel)."""
    assert tile_b % 128 == 0, "tile_b must be a multiple of 128 (lane / bf16 packing)"
    n_atoms, n_bonds = g["n_atoms"], g["n_bonds"]
    n_mols = len(g["a_scope"])
    B_p = _round_up(n_bonds, tile_b)
    A_p = _round_up(n_atoms, 16)
    M_p = _round_up(n_mols, 8)
    b2a, b2revb = g["b2a"], g["b2revb"]

    M_ab = np.zeros((A_p, B_p), np.float32)      # a_message = M_ab @ message
    for a, lst in enumerate(g["a2b_list"]):
        for b in lst:
            M_ab[a, b] += 1.0

    S = np.zeros((B_p, B_p), np.float32)
    for b in range(1, n_bonds):                  # bond 0 (padding) keeps a zero row
        for bp in g["a2b_list"][b2a[b]]:
            S[b, bp] += 1.0
        S[b, b2revb[b]] -= 1.0                   # exact cancellation -> entries >= 0

    # small non-negative integer counts -> exactly representable in bf16
    assert S.min() >= 0.0 and S.max() <= 256.0 and M_ab.max() <= 256.0

    R = np.zeros((M_p, A_p), np.float32)         # per-molecule mean readout
    for m, (st, sz) in enumerate(g["a_scope"]):
        if sz > 0:
            R[m, st:st + sz] = 1.0 / sz

    # per-row-tile nonzero column tiles of S (block-sparsity table)
    nbt = B_p // tile_b
    nz_cols, nk = [], []
    for ti in range(nbt):
        blk = S[ti * tile_b:(ti + 1) * tile_b].reshape(tile_b, nbt, tile_b)
        nz = np.where(blk.any(axis=(0, 2)))[0].astype(np.int32)
        nz_cols.append(nz)
        nk.append(len(nz))
    max_k = max(1, max(nk))
    ct = np.zeros((nbt, max_k), np.int32)
    for ti, nz in enumerate(nz_cols):
        if len(nz):
            ct[ti, :len(nz)] = nz
            ct[ti, len(nz):] = nz[-1]            # repeat last valid -> no extra DMA

    f_atoms_p = np.zeros((A_p, g["f_atoms"].shape[1]), np.float32)
    f_atoms_p[:n_atoms] = np.asarray(g["f_atoms"])
    f_bonds_p = np.zeros((B_p, g["f_bonds"].shape[1]), np.float32)
    f_bonds_p[:n_bonds] = np.asarray(g["f_bonds"])

    return dict(f_atoms=jnp.asarray(f_atoms_p),
                f_bonds=jnp.asarray(f_bonds_p),
                S=jnp.asarray(S, jnp.bfloat16),
                M_ab=jnp.asarray(M_ab, jnp.bfloat16),
                R=jnp.asarray(R, jnp.float32),
                col_tiles=jnp.asarray(ct.reshape(-1)),
                n_col_tiles=jnp.asarray(np.asarray(nk, np.int32)),
                max_k=max_k,
                n_mols=n_mols, tile_b=tile_b)


# ---------------------------------------------------------------------------
# Plain-JAX reference (faithful to the torch gather-based forward, f32)
# ---------------------------------------------------------------------------
def mpn_encoder_reference(f_atoms, f_bonds, a2b, b2a, b2revb, a_scope,
                          W_i, W_h, W_o, b_o, depth):
    inp = f_bonds @ W_i.T
    msg = jnp.maximum(inp, 0.0)
    for _ in range(depth - 1):
        a_msg = msg[a2b].sum(axis=1)             # index_select_ND + sum
        new = a_msg[b2a] - msg[b2revb]
        msg = jnp.maximum(inp + new @ W_h.T, 0.0)
    a_msg = msg[a2b].sum(axis=1)
    a_input = jnp.concatenate([f_atoms, a_msg], axis=1)
    atom_hiddens = jnp.maximum(a_input @ W_o.T + b_o, 0.0)
    mol_vecs = []
    for (a_start, a_size) in a_scope:
        if a_size == 0:
            mol_vecs.append(jnp.zeros((W_o.shape[0],), jnp.float32))
        else:
            cur = atom_hiddens[a_start:a_start + a_size]
            mol_vecs.append(cur.sum(axis=0) / a_size)     # aggregation='mean'
    return jnp.stack(mol_vecs, axis=0)


# ---------------------------------------------------------------------------
if __name__ == "__main__":
    atom_fdim, bond_fdim, hidden, depth = 30, 44, 48, 3
    sizes = [20, 30, 25, 18]          # 4 molecules (chains) -> 179 directed bonds
    tile_b = 128                      # multiple of 128; use 256 for realistic batches

    key = jax.random.PRNGKey(0)
    kg, kwi, kwh, kwo, kbo = jax.random.split(key, 5)

    # parameters: W_i/W_h bias=False (default), W_o has bias
    W_i = 0.1 * jax.random.normal(kwi, (hidden, bond_fdim), jnp.float32)
    W_h = 0.1 * jax.random.normal(kwh, (hidden, hidden), jnp.float32)
    W_o = 0.1 * jax.random.normal(kwo, (hidden, atom_fdim + hidden), jnp.float32)
    b_o = 0.1 * jax.random.normal(kbo, (hidden,), jnp.float32)
    params = (W_i, W_h, W_o, b_o)

    g = build_batch(sizes, atom_fdim, bond_fdim, kg)
    prepared = prepare_graph(g, tile_b=tile_b)

    out = mpn_forward([prepared], params, depth)
    out = jax.block_until_ready(out)

    ref = mpn_encoder_reference(g["f_atoms"], g["f_bonds"], jnp.asarray(g["a2b"]),
                                jnp.asarray(g["b2a"]), jnp.asarray(g["b2revb"]),
                                g["a_scope"], W_i, W_h, W_o, b_o, depth)
    # bf16 message / weight path -> loosened tolerances vs the f32 reference
    np.testing.assert_allclose(np.asarray(out), np.asarray(ref),
                               rtol=2e-2, atol=1e-2)
    assert out.shape == (len(sizes), hidden)
    print("KERNEL_OK")
</pallas_src>

<mosaic_0001>
module attributes {stable_mosaic.version = 11 : i64} {
  func.func @_mpn_fused_kernel(%arg0: i32, %arg1: i32, %arg2: i32, %arg3: memref<4xi32, #tpu.memory_space<smem>>, %arg4: memref<2xi32, #tpu.memory_space<smem>>, %arg5: memref<128x128xf32, #tpu.memory_space<vmem>>, %arg6: memref<128x128xbf16, #tpu.memory_space<vmem>>, %arg7: memref<96x128xbf16, #tpu.memory_space<vmem>>, %arg8: memref<96x128xf32, #tpu.memory_space<vmem>>, %arg9: memref<8x96xf32, #tpu.memory_space<vmem>>, %arg10: memref<128x128xf32, #tpu.memory_space<vmem>>, %arg11: memref<128x128xbf16, #tpu.memory_space<vmem>>, %arg12: memref<128x128xf32, #tpu.memory_space<vmem>>, %arg13: memref<128x128xbf16, #tpu.memory_space<vmem>>, %arg14: memref<1x128xf32, #tpu.memory_space<vmem>>, %arg15: memref<8x128xf32, #tpu.memory_space<vmem>>, %arg16: memref<256x128xf32, #tpu.memory_space<vmem>>, %arg17: memref<256x128xbf16, #tpu.memory_space<vmem>>, %arg18: memref<256x128xbf16, #tpu.memory_space<vmem>>, %arg19: memref<128x128xf32, #tpu.memory_space<vmem>>, %arg20: memref<96x128xf32, #tpu.memory_space<vmem>>) attributes {dimension_semantics = [#tpu.dimension_semantics<arbitrary>, #tpu.dimension_semantics<arbitrary>, #tpu.dimension_semantics<arbitrary>], iteration_bounds = array<i64: 4, 2, 2>, scalar_prefetch = 2 : i64, scratch_operands = 5 : i64, tpu.core_type = #tpu.core_type<tc>, window_params = [{transform_indices = @transform_0, window_bounds = array<i64: 128, 128>}, {transform_indices = @transform_1, window_bounds = array<i64: 128, 128>}, {transform_indices = @transform_2, window_bounds = array<i64: 96, 128>}, {pipeline_mode = #tpu.pipeline_mode<synchronous>, transform_indices = @transform_3, window_bounds = array<i64: 96, 128>}, {pipeline_mode = #tpu.pipeline_mode<synchronous>, transform_indices = @transform_4, window_bounds = array<i64: 8, 96>}, {pipeline_mode = #tpu.pipeline_mode<synchronous>, transform_indices = @transform_5, window_bounds = array<i64: 128, 128>}, {pipeline_mode = #tpu.pipeline_mode<synchronous>, transform_indices = @transform_6, window_bounds = array<i64: 128, 128>}, {pipeline_mode = #tpu.pipeline_mode<synchronous>, transform_indices = @transform_7, window_bounds = array<i64: 128, 128>}, {pipeline_mode = #tpu.pipeline_mode<synchronous>, transform_indices = @transform_8, window_bounds = array<i64: 128, 128>}, {pipeline_mode = #tpu.pipeline_mode<synchronous>, transform_indices = @transform_9, window_bounds = array<i64: 1, 128>}, {pipeline_mode = #tpu.pipeline_mode<synchronous>, transform_indices = @transform_10, window_bounds = array<i64: 8, 128>}]} {
    %c128_i32 = arith.constant 128 : i32
    %0 = arith.muli %arg1, %c128_i32 : i32
    %1 = tpu.assume_multiple %0, 128 : i32
    %c1_i32 = arith.constant 1 : i32
    %2 = arith.cmpi sge, %arg0, %c1_i32 : i32
    %c2_i32 = arith.constant 2 : i32
    %3 = arith.cmpi sle, %arg0, %c2_i32 : i32
    %4 = arith.andi %2, %3 : i1
    %c0_i32 = arith.constant 0 : i32
    %5 = arith.cmpi eq, %arg0, %c0_i32 : i32
    %c0_i32_0 = arith.constant 0 : i32
    %6 = arith.cmpi eq, %arg1, %c0_i32_0 : i32
    %7 = arith.andi %5, %6 : i1
    %c0_i32_1 = arith.constant 0 : i32
    %8 = arith.cmpi eq, %arg2, %c0_i32_1 : i32
    %9 = arith.andi %7, %8 : i1
    %10 = arith.extui %9 : i1 to i32
    %c0_i32_2 = arith.constant 0 : i32
    %11 = arith.cmpi ne, %10, %c0_i32_2 : i32
    scf.if %11 {
      %cst = arith.constant 0.000000e+00 : f32
      %65 = vector.broadcast %cst : f32 to vector<8x128xf32>
      %c0 = arith.constant 0 : index
      %c0_26 = arith.constant 0 : index
      %66 = vector.load %arg15[%c0, %c0_26] : memref<8x128xf32, #tpu.memory_space<vmem>>, vector<8x128xf32>
      tpu.vector_store %arg15[%c0, %c0_26], %65 {strides = array<i32>} : memref<8x128xf32, #tpu.memory_space<vmem>>, vector<8x128xf32>,
      %cst_27 = arith.constant 0.000000e+00 : f32
      %67 = vector.broadcast %cst_27 : f32 to vector<96x128xf32>
      %c0_28 = arith.constant 0 : index
      %c0_29 = arith.constant 0 : index
      %68 = vector.load %arg20[%c0_28, %c0_29] : memref<96x128xf32, #tpu.memory_space<vmem>>, vector<96x128xf32>
      tpu.vector_store %arg20[%c0_28, %c0_29], %67 {strides = array<i32>} : memref<96x128xf32, #tpu.memory_space<vmem>>, vector<96x128xf32>,
    } else {
    }
    %c0_i32_3 = arith.constant 0 : i32
    %12 = arith.cmpi eq, %arg0, %c0_i32_3 : i32
    %c0_i32_4 = arith.constant 0 : i32
    %13 = arith.cmpi eq, %arg2, %c0_i32_4 : i32
    %14 = arith.andi %12, %13 : i1
    %15 = arith.extui %14 : i1 to i32
    %c0_i32_5 = arith.constant 0 : i32
    %16 = arith.cmpi ne, %15, %c0_i32_5 : i32
    scf.if %16 {
      %c0 = arith.constant 0 : index
      %c0_26 = arith.constant 0 : index
      %65 = vector.load %arg5[%c0, %c0_26] : memref<128x128xf32, #tpu.memory_space<vmem>>, vector<128x128xf32>
      %c0_27 = arith.constant 0 : index
      %c0_28 = arith.constant 0 : index
      %66 = vector.load %arg10[%c0_27, %c0_28] : memref<128x128xf32, #tpu.memory_space<vmem>>, vector<128x128xf32>
      %cst = arith.constant dense<0.000000e+00> : vector<128x128xf32>
      %67 = tpu.matmul %65, %66, %cst {dimension_numbers = #tpu.dot_dimension_numbers<[1], [0], [0], [1], [0, 0, 1, 1], [], []>} : vector<128x128xf32>, vector<128x128xf32>, vector<128x128xf32> -> vector<128x128xf32>
      %68 = arith.index_cast %1 : i32 to index
      %c0_29 = arith.constant 0 : index
      %69 = vector.load %arg16[%68, %c0_29] : memref<256x128xf32, #tpu.memory_space<vmem>>, vector<128x128xf32>
      tpu.vector_store %arg16[%68, %c0_29], %67 {strides = array<i32>} : memref<256x128xf32, #tpu.memory_space<vmem>>, vector<128x128xf32>,
      %cst_30 = arith.constant 0.000000e+00 : f32
      %70 = vector.broadcast %cst_30 : f32 to vector<128x128xf32>
      %71 = arith.maximumf %67, %70 : vector<128x128xf32>
      %72 = arith.truncf %71 : vector<128x128xf32> to vector<128x128xbf16>
      %73 = arith.index_cast %1 : i32 to index
      %c0_31 = arith.constant 0 : index
      %74 = vector.load %arg17[%73, %c0_31] : memref<256x128xbf16, #tpu.memory_space<vmem>>, vector<128x128xbf16>
      tpu.vector_store %arg17[%73, %c0_31], %72 {strides = array<i32>} : memref<256x128xbf16, #tpu.memory_space<vmem>>, vector<128x128xbf16>,
    } else {
    }
    %c0_i32_6 = arith.constant 0 : i32
    %17 = arith.cmpi eq, %arg2, %c0_i32_6 : i32
    %18 = arith.andi %4, %17 : i1
    %19 = arith.extui %18 : i1 to i32
    %c0_i32_7 = arith.constant 0 : i32
    %20 = arith.cmpi ne, %19, %c0_i32_7 : i32
    scf.if %20 {
      %cst = arith.constant 0.000000e+00 : f32
      %65 = vector.broadcast %cst : f32 to vector<128x128xf32>
      %c0 = arith.constant 0 : index
      %c0_26 = arith.constant 0 : index
      %66 = vector.load %arg19[%c0, %c0_26] : memref<128x128xf32, #tpu.memory_space<vmem>>, vector<128x128xf32>
      tpu.vector_store %arg19[%c0, %c0_26], %65 {strides = array<i32>} : memref<128x128xf32, #tpu.memory_space<vmem>>, vector<128x128xf32>,
    } else {
    }
    %c2_i32_8 = arith.constant 2 : i32
    %c0_i32_9 = arith.constant 0 : i32
    %21 = arith.cmpi eq, %c2_i32_8, %c0_i32_9 : i32
    %c1_i32_10 = arith.constant 1 : i32
    %22 = arith.select %21, %c1_i32_10, %c2_i32_8 : i32
    %23 = arith.remsi %arg0, %22 : i32
    %c0_i32_11 = arith.constant 0 : i32
    %24 = arith.cmpi ne, %23, %c0_i32_11 : i32
    %c0_i32_12 = arith.constant 0 : i32
    %25 = arith.cmpi slt, %23, %c0_i32_12 : i32
    %c0_i32_13 = arith.constant 0 : i32
    %26 = arith.cmpi slt, %22, %c0_i32_13 : i32
    %27 = arith.xori %25, %26 : i1
    %28 = arith.andi %27, %24 : i1
    %29 = arith.addi %23, %22 : i32
    %30 = arith.select %28, %29, %23 : i32
    %c1_i32_14 = arith.constant 1 : i32
    %31 = arith.cmpi eq, %30, %c1_i32_14 : i32
    %32 = arith.index_cast %arg1 : i32 to index
    %33 = memref.load %arg4[%32] : memref<2xi32, #tpu.memory_space<smem>>
    %34 = arith.cmpi slt, %arg2, %33 : i32
    %c1_i32_15 = arith.constant 1 : i32
    %35 = arith.cmpi eq, %arg2, %c1_i32_15 : i32
    %36 = arith.andi %4, %31 : i1
    %37 = arith.andi %36, %34 : i1
    %38 = arith.extui %37 : i1 to i32
    %c0_i32_16 = arith.constant 0 : i32
    %39 = arith.cmpi ne, %38, %c0_i32_16 : i32
    scf.if %39 {
      %c2_i32_26 = arith.constant 2 : i32
      %65 = arith.muli %arg1, %c2_i32_26 : i32
      %66 = arith.addi %65, %arg2 : i32
      %67 = arith.index_cast %66 : i32 to index
      %68 = memref.load %arg3[%67] : memref<4xi32, #tpu.memory_space<smem>>
      %c128_i32_27 = arith.constant 128 : i32
      %69 = arith.muli %68, %c128_i32_27 : i32
      %70 = tpu.assume_multiple %69, 128 : i32
      %c0 = arith.constant 0 : index
      %c0_28 = arith.constant 0 : index
      %71 = vector.load %arg19[%c0, %c0_28] : memref<128x128xf32, #tpu.memory_space<vmem>>, vector<128x128xf32>
      %c0_29 = arith.constant 0 : index
      %c0_30 = arith.constant 0 : index
      %72 = vector.load %arg6[%c0_29, %c0_30] : memref<128x128xbf16, #tpu.memory_space<vmem>>, vector<128x128xbf16>
      %73 = arith.index_cast %70 : i32 to index
      %c0_31 = arith.constant 0 : index
      %74 = vector.load %arg17[%73, %c0_31] : memref<256x128xbf16, #tpu.memory_space<vmem>>, vector<128x128xbf16>
      %cst = arith.constant dense<0.000000e+00> : vector<128x128xf32>
      %75 = tpu.matmul %72, %74, %cst {dimension_numbers = #tpu.dot_dimension_numbers<[1], [0], [0], [1], [0, 0, 1, 1], [], []>} : vector<128x128xbf16>, vector<128x128xbf16>, vector<128x128xf32> -> vector<128x128xf32>
      %76 = arith.addf %71, %75 : vector<128x128xf32>
      %c0_32 = arith.constant 0 : index
      %c0_33 = arith.constant 0 : index
      %77 = vector.load %arg19[%c0_32, %c0_33] : memref<128x128xf32, #tpu.memory_space<vmem>>, vector<128x128xf32>
      tpu.vector_store %arg19[%c0_32, %c0_33], %76 {strides = array<i32>} : memref<128x128xf32, #tpu.memory_space<vmem>>, vector<128x128xf32>,
    } else {
    }
    %true = arith.constant true
    %40 = arith.xori %31, %true : i1
    %41 = arith.andi %4, %40 : i1
    %42 = arith.andi %41, %34 : i1
    %43 = arith.extui %42 : i1 to i32
    %c0_i32_17 = arith.constant 0 : i32
    %44 = arith.cmpi ne, %43, %c0_i32_17 : i32
    scf.if %44 {
      %c2_i32_26 = arith.constant 2 : i32
      %65 = arith.muli %arg1, %c2_i32_26 : i32
      %66 = arith.addi %65, %arg2 : i32
      %67 = arith.index_cast %66 : i32 to index
      %68 = memref.load %arg3[%67] : memref<4xi32, #tpu.memory_space<smem>>
      %c128_i32_27 = arith.constant 128 : i32
      %69 = arith.muli %68, %c128_i32_27 : i32
      %70 = tpu.assume_multiple %69, 128 : i32
      %c0 = arith.constant 0 : index
      %c0_28 = arith.constant 0 : index
      %71 = vector.load %arg19[%c0, %c0_28] : memref<128x128xf32, #tpu.memory_space<vmem>>, vector<128x128xf32>
      %c0_29 = arith.constant 0 : index
      %c0_30 = arith.constant 0 : index
      %72 = vector.load %arg6[%c0_29, %c0_30] : memref<128x128xbf16, #tpu.memory_space<vmem>>, vector<128x128xbf16>
      %73 = arith.index_cast %70 : i32 to index
      %c0_31 = arith.constant 0 : index
      %74 = vector.load %arg18[%73, %c0_31] : memref<256x128xbf16, #tpu.memory_space<vmem>>, vector<128x128xbf16>
      %cst = arith.constant dense<0.000000e+00> : vector<128x128xf32>
      %75 = tpu.matmul %72, %74, %cst {dimension_numbers = #tpu.dot_dimension_numbers<[1], [0], [0], [1], [0, 0, 1, 1], [], []>} : vector<128x128xbf16>, vector<128x128xbf16>, vector<128x128xf32> -> vector<128x128xf32>
      %76 = arith.addf %71, %75 : vector<128x128xf32>
      %c0_32 = arith.constant 0 : index
      %c0_33 = arith.constant 0 : index
      %77 = vector.load %arg19[%c0_32, %c0_33] : memref<128x128xf32, #tpu.memory_space<vmem>>, vector<128x128xf32>
      tpu.vector_store %arg19[%c0_32, %c0_33], %76 {strides = array<i32>} : memref<128x128xf32, #tpu.memory_space<vmem>>, vector<128x128xf32>,
    } else {
    }
    %45 = arith.andi %4, %31 : i1
    %46 = arith.andi %45, %35 : i1
    %47 = arith.extui %46 : i1 to i32
    %c0_i32_18 = arith.constant 0 : i32
    %48 = arith.cmpi ne, %47, %c0_i32_18 : i32
    scf.if %48 {
      %c0 = arith.constant 0 : index
      %c0_26 = arith.constant 0 : index
      %65 = vector.load %arg19[%c0, %c0_26] : memref<128x128xf32, #tpu.memory_space<vmem>>, vector<128x128xf32>
      %66 = arith.truncf %65 : vector<128x128xf32> to vector<128x128xbf16>
      %c0_27 = arith.constant 0 : index
      %c0_28 = arith.constant 0 : index
      %67 = vector.load %arg11[%c0_27, %c0_28] : memref<128x128xbf16, #tpu.memory_space<vmem>>, vector<128x128xbf16>
      %cst = arith.constant dense<0.000000e+00> : vector<128x128xf32>
      %68 = tpu.matmul %66, %67, %cst {dimension_numbers = #tpu.dot_dimension_numbers<[1], [0], [0], [1], [0, 0, 1, 1], [], []>} : vector<128x128xbf16>, vector<128x128xbf16>, vector<128x128xf32> -> vector<128x128xf32>
      %69 = arith.index_cast %1 : i32 to index
      %c0_29 = arith.constant 0 : index
      %70 = vector.load %arg16[%69, %c0_29] : memref<256x128xf32, #tpu.memory_space<vmem>>, vector<128x128xf32>
      %71 = arith.addf %70, %68 : vector<128x128xf32>
      %cst_30 = arith.constant 0.000000e+00 : f32
      %72 = vector.broadcast %cst_30 : f32 to vector<128x128xf32>
      %73 = arith.maximumf %71, %72 : vector<128x128xf32>
      %74 = arith.truncf %73 : vector<128x128xf32> to vector<128x128xbf16>
      %75 = arith.index_cast %1 : i32 to index
      %c0_31 = arith.constant 0 : index
      %76 = vector.load %arg18[%75, %c0_31] : memref<256x128xbf16, #tpu.memory_space<vmem>>, vector<128x128xbf16>
      tpu.vector_store %arg18[%75, %c0_31], %74 {strides = array<i32>} : memref<256x128xbf16, #tpu.memory_space<vmem>>, vector<128x128xbf16>,
    } else {
    }
    %true_19 = arith.constant true
    %49 = arith.xori %31, %true_19 : i1
    %50 = arith.andi %4, %49 : i1
    %51 = arith.andi %50, %35 : i1
    %52 = arith.extui %51 : i1 to i32
    %c0_i32_20 = arith.constant 0 : i32
    %53 = arith.cmpi ne, %52, %c0_i32_20 : i32
    scf.if %53 {
      %c0 = arith.constant 0 : index
      %c0_26 = arith.constant 0 : index
      %65 = vector.load %arg19[%c0, %c0_26] : memref<128x128xf32, #tpu.memory_space<vmem>>, vector<128x128xf32>
      %66 = arith.truncf %65 : vector<128x128xf32> to vector<128x128xbf16>
      %c0_27 = arith.constant 0 : index
      %c0_28 = arith.constant 0 : index
      %67 = vector.load %arg11[%c0_27, %c0_28] : memref<128x128xbf16, #tpu.memory_space<vmem>>, vector<128x128xbf16>
      %cst = arith.constant dense<0.000000e+00> : vector<128x128xf32>
      %68 = tpu.matmul %66, %67, %cst {dimension_numbers = #tpu.dot_dimension_numbers<[1], [0], [0], [1], [0, 0, 1, 1], [], []>} : vector<128x128xbf16>, vector<128x128xbf16>, vector<128x128xf32> -> vector<128x128xf32>
      %69 = arith.index_cast %1 : i32 to index
      %c0_29 = arith.constant 0 : index
      %70 = vector.load %arg16[%69, %c0_29] : memref<256x128xf32, #tpu.memory_space<vmem>>, vector<128x128xf32>
      %71 = arith.addf %70, %68 : vector<128x128xf32>
      %cst_30 = arith.constant 0.000000e+00 : f32
      %72 = vector.broadcast %cst_30 : f32 to vector<128x128xf32>
      %73 = arith.maximumf %71, %72 : vector<128x128xf32>
      %74 = arith.truncf %73 : vector<128x128xf32> to vector<128x128xbf16>
      %75 = arith.index_cast %1 : i32 to index
      %c0_31 = arith.constant 0 : index
      %76 = vector.load %arg17[%75, %c0_31] : memref<256x128xbf16, #tpu.memory_space<vmem>>, vector<128x128xbf16>
      tpu.vector_store %arg17[%75, %c0_31], %74 {strides = array<i32>} : memref<256x128xbf16, #tpu.memory_space<vmem>>, vector<128x128xbf16>,
    } else {
    }
    %c3_i32 = arith.constant 3 : i32
    %54 = arith.cmpi eq, %arg0, %c3_i32 : i32
    %c0_i32_21 = arith.constant 0 : i32
    %55 = arith.cmpi eq, %arg2, %c0_i32_21 : i32
    %56 = arith.andi %54, %55 : i1
    %57 = arith.extui %56 : i1 to i32
    %c0_i32_22 = arith.constant 0 : i32
    %58 = arith.cmpi ne, %57, %c0_i32_22 : i32
    scf.if %58 {
      %c0 = arith.constant 0 : index
      %c0_26 = arith.constant 0 : index
      %65 = vector.load %arg20[%c0, %c0_26] : memref<96x128xf32, #tpu.memory_space<vmem>>, vector<96x128xf32>
      %c0_27 = arith.constant 0 : index
      %c0_28 = arith.constant 0 : index
      %66 = vector.load %arg7[%c0_27, %c0_28] : memref<96x128xbf16, #tpu.memory_space<vmem>>, vector<96x128xbf16>
      %67 = arith.index_cast %1 : i32 to index
      %c0_29 = arith.constant 0 : index
      %68 = vector.load %arg17[%67, %c0_29] : memref<256x128xbf16, #tpu.memory_space<vmem>>, vector<128x128xbf16>
      %cst = arith.constant dense<0.000000e+00> : vector<96x128xf32>
      %69 = tpu.matmul %66, %68, %cst {dimension_numbers = #tpu.dot_dimension_numbers<[1], [0], [0], [1], [0, 0, 1, 1], [], []>} : vector<96x128xbf16>, vector<128x128xbf16>, vector<96x128xf32> -> vector<96x128xf32>
      %70 = arith.addf %65, %69 : vector<96x128xf32>
      %c0_30 = arith.constant 0 : index
      %c0_31 = arith.constant 0 : index
      %71 = vector.load %arg20[%c0_30, %c0_31] : memref<96x128xf32, #tpu.memory_space<vmem>>, vector<96x128xf32>
      tpu.vector_store %arg20[%c0_30, %c0_31], %70 {strides = array<i32>} : memref<96x128xf32, #tpu.memory_space<vmem>>, vector<96x128xf32>,
    } else {
    }
    %c3_i32_23 = arith.constant 3 : i32
    %59 = arith.cmpi eq, %arg0, %c3_i32_23 : i32
    %c1_i32_24 = arith.constant 1 : i32
    %60 = arith.cmpi eq, %arg1, %c1_i32_24 : i32
    %61 = arith.andi %59, %60 : i1
    %62 = arith.andi %61, %35 : i1
    %63 = arith.extui %62 : i1 to i32
    %c0_i32_25 = arith.constant 0 : i32
    %64 = arith.cmpi ne, %63, %c0_i32_25 : i32
    scf.if %64 {
      %c0 = arith.constant 0 : index
      %c0_26 = arith.constant 0 : index
      %65 = vector.load %arg8[%c0, %c0_26] : memref<96x128xf32, #tpu.memory_space<vmem>>, vector<96x128xf32>
      %c0_27 = arith.constant 0 : index
      %c0_28 = arith.constant 0 : index
      %66 = vector.load %arg12[%c0_27, %c0_28] : memref<128x128xf32, #tpu.memory_space<vmem>>, vector<128x128xf32>
      %cst = arith.constant dense<0.000000e+00> : vector<96x128xf32>
      %67 = tpu.matmul %65, %66, %cst {dimension_numbers = #tpu.dot_dimension_numbers<[1], [0], [0], [1], [0, 0, 1, 1], [], []>} : vector<96x128xf32>, vector<128x128xf32>, vector<96x128xf32> -> vector<96x128xf32>
      %c0_29 = arith.constant 0 : index
      %c0_30 = arith.constant 0 : index
      %68 = vector.load %arg20[%c0_29, %c0_30] : memref<96x128xf32, #tpu.memory_space<vmem>>, vector<96x128xf32>
      %69 = arith.truncf %68 : vector<96x128xf32> to vector<96x128xbf16>
      %c0_31 = arith.constant 0 : index
      %c0_32 = arith.constant 0 : index
      %70 = vector.load %arg13[%c0_31, %c0_32] : memref<128x128xbf16, #tpu.memory_space<vmem>>, vector<128x128xbf16>
      %cst_33 = arith.constant dense<0.000000e+00> : vector<96x128xf32>
      %71 = tpu.matmul %69, %70, %cst_33 {dimension_numbers = #tpu.dot_dimension_numbers<[1], [0], [0], [1], [0, 0, 1, 1], [], []>} : vector<96x128xbf16>, vector<128x128xbf16>, vector<96x128xf32> -> vector<96x128xf32>
      %72 = arith.addf %67, %71 : vector<96x128xf32>
      %c0_34 = arith.constant 0 : index
      %c0_35 = arith.constant 0 : index
      %73 = vector.load %arg14[%c0_34, %c0_35] : memref<1x128xf32, #tpu.memory_space<vmem>>, vector<1x128xf32>
      %74 = vector.broadcast %73 : vector<1x128xf32> to vector<96x128xf32>
      %75 = arith.addf %72, %74 : vector<96x128xf32>
      %cst_36 = arith.constant 0.000000e+00 : f32
      %76 = vector.broadcast %cst_36 : f32 to vector<96x128xf32>
      %77 = arith.maximumf %75, %76 : vector<96x128xf32>
      %c0_37 = arith.constant 0 : index
      %c0_38 = arith.constant 0 : index
      %78 = vector.load %arg9[%c0_37, %c0_38] : memref<8x96xf32, #tpu.memory_space<vmem>>, vector<8x96xf32>
      %cst_39 = arith.constant dense<0.000000e+00> : vector<8x128xf32>
      %79 = tpu.matmul %78, %77, %cst_39 {dimension_numbers = #tpu.dot_dimension_numbers<[1], [0], [0], [1], [0, 0, 1, 1], [], []>} : vector<8x96xf32>, vector<96x128xf32>, vector<8x128xf32> -> vector<8x128xf32>
      %c0_40 = arith.constant 0 : index
      %c0_41 = arith.constant 0 : index
      %80 = vector.load %arg15[%c0_40, %c0_41] : memref<8x128xf32, #tpu.memory_space<vmem>>, vector<8x128xf32>
      tpu.vector_store %arg15[%c0_40, %c0_41], %79 {strides = array<i32>} : memref<8x128xf32, #tpu.memory_space<vmem>>, vector<8x128xf32>,
    } else {
    }
    return
  }
  func.func @transform_0(%arg0: i32, %arg1: i32, %arg2: i32, %arg3: memref<4xi32, #tpu.memory_space<smem>>, %arg4: memref<2xi32, #tpu.memory_space<smem>>) -> (i32, i32) {
    %c0_i32 = arith.constant 0 : i32
    %0 = arith.cmpi eq, %arg0, %c0_i32 : i32
    %c0_i32_0 = arith.constant 0 : i32
    %1 = arith.select %0, %arg1, %c0_i32_0 : i32
    %c0_i32_1 = arith.constant 0 : i32
    %c0_i32_2 = arith.constant 0 : i32
    return %1, %c0_i32_1 : i32, i32
  }
  func.func @transform_1(%arg0: i32, %arg1: i32, %arg2: i32, %arg3: memref<4xi32, #tpu.memory_space<smem>>, %arg4: memref<2xi32, #tpu.memory_space<smem>>) -> (i32, i32) {
    %c1_i32 = arith.constant 1 : i32
    %0 = arith.cmpi sge, %arg0, %c1_i32 : i32
    %c2_i32 = arith.constant 2 : i32
    %1 = arith.cmpi sle, %arg0, %c2_i32 : i32
    %2 = arith.andi %0, %1 : i1
    %c0_i32 = arith.constant 0 : i32
    %3 = arith.select %2, %arg1, %c0_i32 : i32
    %c2_i32_0 = arith.constant 2 : i32
    %4 = arith.muli %arg1, %c2_i32_0 : i32
    %5 = arith.addi %4, %arg2 : i32
    %6 = arith.index_cast %5 : i32 to index
    %7 = memref.load %arg3[%6] : memref<4xi32, #tpu.memory_space<smem>>
    %c0_i32_1 = arith.constant 0 : i32
    %8 = arith.select %2, %7, %c0_i32_1 : i32
    %c0_i32_2 = arith.constant 0 : i32
    return %3, %8 : i32, i32
  }
  func.func @transform_2(%arg0: i32, %arg1: i32, %arg2: i32, %arg3: memref<4xi32, #tpu.memory_space<smem>>, %arg4: memref<2xi32, #tpu.memory_space<smem>>) -> (i32, i32) {
    %c3_i32 = arith.constant 3 : i32
    %0 = arith.cmpi eq, %arg0, %c3_i32 : i32
    %c0_i32 = arith.constant 0 : i32
    %1 = arith.select %0, %arg1, %c0_i32 : i32
    %c0_i32_0 = arith.constant 0 : i32
    %c0_i32_1 = arith.constant 0 : i32
    return %c0_i32_0, %1 : i32, i32
  }
  func.func @transform_3(%arg0: i32, %arg1: i32, %arg2: i32, %arg3: memref<4xi32, #tpu.memory_space<smem>>, %arg4: memref<2xi32, #tpu.memory_space<smem>>) -> (i32, i32) {
    %c0_i32 = arith.constant 0 : i32
    %c0_i32_0 = arith.constant 0 : i32
    %c0_i32_1 = arith.constant 0 : i32
    return %c0_i32, %c0_i32_0 : i32, i32
  }
  func.func @transform_4(%arg0: i32, %arg1: i32, %arg2: i32, %arg3: memref<4xi32, #tpu.memory_space<smem>>, %arg4: memref<2xi32, #tpu.memory_space<smem>>) -> (i32, i32) {
    %c0_i32 = arith.constant 0 : i32
    %c0_i32_0 = arith.constant 0 : i32
    %c0_i32_1 = arith.constant 0 : i32
    return %c0_i32, %c0_i32_0 : i32, i32
  }
  func.func @transform_5(%arg0: i32, %arg1: i32, %arg2: i32, %arg3: memref<4xi32, #tpu.memory_space<smem>>, %arg4: memref<2xi32, #tpu.memory_space<smem>>) -> (i32, i32) {
    %c0_i32 = arith.constant 0 : i32
    %c0_i32_0 = arith.constant 0 : i32
    %c0_i32_1 = arith.constant 0 : i32
    return %c0_i32, %c0_i32_0 : i32, i32
  }
  func.func @transform_6(%arg0: i32, %arg1: i32, %arg2: i32, %arg3: memref<4xi32, #tpu.memory_space<smem>>, %arg4: memref<2xi32, #tpu.memory_space<smem>>) -> (i32, i32) {
    %c0_i32 = arith.constant 0 : i32
    %c0_i32_0 = arith.constant 0 : i32
    %c0_i32_1 = arith.constant 0 : i32
    return %c0_i32, %c0_i32_0 : i32, i32
  }
  func.func @transform_7(%arg0: i32, %arg1: i32, %arg2: i32, %arg3: memref<4xi32, #tpu.memory_space<smem>>, %arg4: memref<2xi32, #tpu.memory_space<smem>>) -> (i32, i32) {
    %c0_i32 = arith.constant 0 : i32
    %c0_i32_0 = arith.constant 0 : i32
    %c0_i32_1 = arith.constant 0 : i32
    return %c0_i32, %c0_i32_0 : i32, i32
  }
  func.func @transform_8(%arg0: i32, %arg1: i32, %arg2: i32, %arg3: memref<4xi32, #tpu.memory_space<smem>>, %arg4: memref<2xi32, #tpu.memory_space<smem>>) -> (i32, i32) {
    %c0_i32 = arith.constant 0 : i32
    %c0_i32_0 = arith.constant 0 : i32
    %c0_i32_1 = arith.constant 0 : i32
    return %c0_i32, %c0_i32_0 : i32, i32
  }
  func.func @transform_9(%arg0: i32, %arg1: i32, %arg2: i32, %arg3: memref<4xi32, #tpu.memory_space<smem>>, %arg4: memref<2xi32, #tpu.memory_space<smem>>) -> (i32, i32) {
    %c0_i32 = arith.constant 0 : i32
    %c0_i32_0 = arith.constant 0 : i32
    %c0_i32_1 = arith.constant 0 : i32
    return %c0_i32, %c0_i32_0 : i32, i32
  }
  func.func @transform_10(%arg0: i32, %arg1: i32, %arg2: i32, %arg3: memref<4xi32, #tpu.memory_space<smem>>, %arg4: memref<2xi32, #tpu.memory_space<smem>>) -> (i32, i32) {
    %c0_i32 = arith.constant 0 : i32
    %c0_i32_0 = arith.constant 0 : i32
    %c0_i32_1 = arith.constant 0 : i32
    return %c0_i32, %c0_i32_0 : i32, i32
  }
}

</mosaic_0001>

<llo_original>
// kernel: tpu_custom_call.1
$region0: #{tpu_custom_call.1}
  #allocation0 [shape = 'u32[]', space=smem, size = 0x4, offset = 0x4, fixed_abs, tag = 'smem constant byte address 0x4 - core index']
  #allocation1 [shape = 'u32[72,128]{1,0:T(1,128)}', space=vmem, size = 0x9000, scoped, tag = 'internal scratch']
  #allocation2 [shape = 'f32[256,128]{1,0:T(8,128)}', space=vmem, size = 0x20000, scoped, tag = 'scratch operand']
  #allocation3 [shape = 'bf16[256,128]{1,0:T(8,128)(2,1)}', space=vmem, size = 0x10000, scoped, tag = 'scratch operand']
  #allocation4 [shape = 'bf16[256,128]{1,0:T(8,128)(2,1)}', space=vmem, size = 0x10000, scoped, tag = 'scratch operand']
  #allocation5 [shape = 'f32[128,128]{1,0:T(8,128)}', space=vmem, size = 0x10000, scoped, tag = 'scratch operand']
  #allocation6 [shape = 'f32[96,128]{1,0:T(8,128)}', space=vmem, size = 0xc000, scoped, tag = 'scratch operand']
  #allocation7 [shape = 's32[1]{0}', space=sflag, size = 0x4, scoped, tag = 'scoped memory for tpu_custom_call.1']
  #allocation8 [shape = 'u8[512]{0}', space=smem, size = 0x200, scoped, tag = 'prefetched SMEM operand 0']
  #allocation9 [shape = 'u8[512]{0}', space=smem, size = 0x200, scoped, tag = 'prefetched SMEM operand 1']
  %s0 = inlined_call_operand.hbm [shape: s32[4], index: 0, kind: input, shape index: {}]
  %s1 = inlined_call_operand.hbm [shape: s32[2], index: 1, kind: input, shape index: {}]
  %s2 = inlined_call_operand.hbm [shape: f32[256,128], index: 2, kind: input, shape index: {}]
  %s3 = inlined_call_operand.hbm [shape: bf16[256,256], index: 3, kind: input, shape index: {}]
  %s4 = inlined_call_operand.hbm [shape: bf16[96,256], index: 4, kind: input, shape index: {}]
  %s5 = inlined_call_operand.hbm [shape: f32[96,128], index: 5, kind: input, shape index: {}]
  %s6 = inlined_call_operand.hbm [shape: f32[8,96], index: 6, kind: input, shape index: {}]
  %s7 = inlined_call_operand.hbm [shape: f32[128,128], index: 7, kind: input, shape index: {}]
  %s8 = inlined_call_operand.hbm [shape: bf16[128,128], index: 8, kind: input, shape index: {}]
  %s9 = inlined_call_operand.hbm [shape: f32[128,128], index: 9, kind: input, shape index: {}]
  %s10 = inlined_call_operand.hbm [shape: bf16[128,128], index: 10, kind: input, shape index: {}]
  %s11 = inlined_call_operand.vmem [shape: f32[1,128], index: 11, kind: input, shape index: {}]
  %s12 = inlined_call_operand.hbm [shape: f32[8,128], index: 12, kind: output, shape index: {}]
  %s13 = sld [smem:[#allocation0]]
  $region145: #{tpu_custom_call.1} parent=0
    _
  %s15 = ssub.s32 1, %s13
  %s16 = scalar_select 0, %s15, %s13
  %s18 = sshll.u32 %s0, 4
  %s19 = int_to_ptr.hbm [resolvable:$true] %s18
  %21 = dma.hbm_to_smem %s19, 16, [#allocation8], [#allocation7]
  %s23 = sshll.u32 %s1, 4
  %s24 = int_to_ptr.hbm [resolvable:$true] %s23
  %26 = dma.hbm_to_smem %s24, 16, [#allocation9], [#allocation7]
  %28 = dma.done [#allocation7], 32
  %29 = sfence
  $region1: #{tpu_custom_call.1} parent=0
    #allocation10 [shape = 'u8[131072]{0}', space=vmem, size = 0x20000, scoped, tag = 'input window, operand 2']
    #allocation11 [shape = 's32[2]{0}', space=sflag, size = 0x8, scoped, tag = 'scoped memory for tpu_custom_call.1']
    #allocation12 [shape = 's32[2]{0}', space=sflag, size = 0x8, scoped, tag = 'scoped memory for tpu_custom_call.1']
    #allocation13 [shape = 'u8[65536]{0}', space=vmem, size = 0x10000, scoped, tag = 'input window, operand 3']
    #allocation14 [shape = 's32[2]{0}', space=sflag, size = 0x8, scoped, tag = 'scoped memory for tpu_custom_call.1']
    #allocation15 [shape = 'u8[49152]{0}', space=vmem, size = 0xc000, scoped, tag = 'input window, operand 4']
    #allocation16 [shape = 'u8[49152]{0}', space=vmem, size = 0xc000, scoped, tag = 'input window, operand 5, single buffered']
    #allocation17 [shape = 's32[1]{0}', space=sflag, size = 0x4, scoped, tag = 'scoped memory for tpu_custom_call.1']
    #allocation18 [shape = 'u8[4096]{0}', space=vmem, size = 0x1000, scoped, tag = 'input window, operand 6, single buffered']
    #allocation19 [shape = 'u8[65536]{0}', space=vmem, size = 0x10000, scoped, tag = 'input window, operand 7, single buffered']
    #allocation20 [shape = 's32[1]{0}', space=sflag, size = 0x4, scoped, tag = 'scoped memory for tpu_custom_call.1']
    #allocation21 [shape = 'u8[32768]{0}', space=vmem, size = 0x8000, scoped, tag = 'input window, operand 8, single buffered']
    #allocation22 [shape = 'u8[65536]{0}', space=vmem, size = 0x10000, scoped, tag = 'input window, operand 9, single buffered']
    #allocation23 [shape = 's32[1]{0}', space=sflag, size = 0x4, scoped, tag = 'scoped memory for tpu_custom_call.1']
    #allocation24 [shape = 'u8[32768]{0}', space=vmem, size = 0x8000, scoped, tag = 'input window, operand 10, single buffered']
    #allocation25 [shape = 'u8[4096]{0}', space=vmem, size = 0x1000, scoped, tag = 'output window, operand 0, single buffered']
    %30 = vsyncpa [#allocation11], 0
    %s31 = scalar_lea.sflag [#allocation11], 1
    %32 = vsyncpa %s31, 0
    %33 = vsyncpa [#allocation14], 0
    %s34 = scalar_lea.sflag [#allocation14], 1
    %35 = vsyncpa %s34, 0
    %36 = vsyncpa [#allocation17], 0
    %37 = vsyncpa [#allocation20], 0
    %38 = vsyncpa [#allocation23], 0
    %39 = vsyncpa [#allocation12], 0
    loop: start=0, step=1, limit=18
    $region2: #{tpu_custom_call.1} parent=1 // loop_pre_header
      _
    $region3: #{tpu_custom_call.1} parent=1 // loop_header
      %s41 = sphi 0, %s45
      %p42 = scmp.ge.s32.totalorder %s41, 18
      %s48 = sphi 0, %s67
      %s49 = sphi 0, %s63
      %s50 = sphi 0, %s59
      %s51 = sphi 0, %s48
      %s52 = sphi 0, %s49
      %s53 = sphi 0, %s50
      %s54 = sphi 0, %s51
      %s55 = sphi 0, %s52
      %s56 = sphi 0, %s53
      %s74 = sphi 0, %s76
      %s77 = sphi 0, %s74
      %s78 = sphi 0, %s77
      %s94 = sphi 0, %s78
      %s120 = sphi 0, %s122
      %s123 = sphi 0, %s120
      %s124 = sphi 0, %s123
      %s140 = sphi 0, %s124
      %s150 = sphi 0, %s152
      %s153 = sphi 0, %s150
      %s154 = sphi 0, %s153
      %s170 = sphi 0, %s154
      %s174 = sphi 0, %s174
      %s176 = sphi 0, %s174
      %s177 = sphi 0, %s176
      %s191 = sphi 0, %s177
      %s195 = sphi 0, %s195
      %s197 = sphi 0, %s195
      %s198 = sphi 0, %s197
      %s212 = sphi 0, %s198
      %s216 = sphi 0, %s216
      %s218 = sphi 0, %s216
      %s219 = sphi 0, %s218
      %s233 = sphi 0, %s219
      %s237 = sphi 0, %s237
      %s239 = sphi 0, %s237
      %s240 = sphi 0, %s239
      %s254 = sphi 0, %s240
      %s258 = sphi 0, %s258
      %s260 = sphi 0, %s258
      %s261 = sphi 0, %s260
      %s275 = sphi 0, %s261
      %s279 = sphi 0, %s279
      %s281 = sphi 0, %s279
      %s282 = sphi 0, %s281
      %s296 = sphi 0, %s282
      %s300 = sphi 0, %s300
      %s302 = sphi 0, %s300
      %s303 = sphi 0, %s302
      %s317 = sphi 0, %s303
      %s321 = sphi 0, %s321
      %s323 = sphi 0, %s321
      %s324 = sphi 0, %s323
      %s338 = sphi 0, %s324
    $region4: #{tpu_custom_call.1} parent=1 // loop_header_branch
      %44 = sbr.rel (%p42) target = $region8
    $region5: #{tpu_custom_call.1} parent=1 // loop_body
      %s46 = ssub.s32 %s41, 1
      %s47 = ssub.s32 %s41, 2
      %s57 = sadd.s32 1, %s50
      %p58 = scmp.ge.s32.totalorder %s57, 2
      %s59 = scalar_select %p58, 0, %s57
      %s60 = sadd.s32 1, %s49
      %s61 = scalar_select %p58, %s60, %s49
      %p62 = scmp.ge.s32.totalorder %s61, 2
      %s63 = scalar_select %p62, 0, %s61
      %s64 = sadd.s32 1, %s48
      %s65 = scalar_select %p62, %s64, %s48
      %p66 = scmp.ge.s32.totalorder %s65, 4
      %s67 = scalar_select %p66, 0, %s65
      %p68 = scmp.eq.s32.totalorder %s48, 0
      %s69 = scalar_select %p68, %s49, 0
      %p70 = scmp.eq.s32.totalorder %s67, 0
      %s71 = scalar_select %p70, %s63, 0
      %s72 = ssub.s32 %s69, %s71
      %p73 = scmp.eq.s32.totalorder %s72, 0
      %s75 = sadd.s32 %s74, 1
      %s76 = scalar_select %p73, %s74, %s75
      %p79 = pneg %p73
      %p80 = scmp.eq.s32.totalorder %s41, 15
      %p81 = por %p79, %p80
      %p82 = scmp.ne.s32.totalorder %s74, %s77
      %p83 = scmp.eq.s32.totalorder %s41, 0
      %p84 = por %p82, %p83
      %p85 = scmp.ne.s32.totalorder %s74, %s77
      %p86 = scmp.eq.s32.totalorder %s46, 15
      %p87 = por %p85, %p86
      %p88 = scmp.ne.s32.totalorder %s77, %s78
      %p89 = scmp.eq.s32.totalorder %s46, 0
      %p90 = por %p88, %p89
      %p91 = scmp.ne.s32.totalorder %s77, %s78
      %p92 = scmp.eq.s32.totalorder %s47, 15
      %p93 = por %p91, %p92
      %p95 = scmp.ne.s32.totalorder %s78, %s94
      %p96 = scmp.eq.s32.totalorder %s47, 0
      %p97 = por %p95, %p96
      %p98 = scmp.ge.s32.totalorder %s48, 1
      %p99 = scmp.le.s32.totalorder %s48, 2
      %p100 = pnand %p98, %p99
      %p101 = pneg %p100
      %s102 = scalar_select %p101, %s49, 0
      %s103 = smul.u32 %s49, 2
      %s104 = sadd.s32 %s103, %s50
      %s105 = sld [smem:[#allocation8 + %s104]]
      %s106 = scalar_select %p101, %s105, 0
      %p107 = scmp.ge.s32.totalorder %s67, 1
      %p108 = scmp.le.s32.totalorder %s67, 2
      %p109 = pnand %p107, %p108
      %p110 = pneg %p109
      %s111 = scalar_select %p110, %s63, 0
      %s112 = smul.u32 %s63, 2
      %s113 = sadd.s32 %s112, %s59
      %s114 = sld [smem:[#allocation8 + %s113]]
      %s115 = scalar_select %p110, %s114, 0
      %s116 = ssub.s32 %s102, %s111
      %s117 = ssub.s32 %s106, %s115
      %s118 = sor.u32 %s116, %s117
      %p119 = scmp.eq.s32.totalorder %s118, 0
      %s121 = sadd.s32 %s120, 1
      %s122 = scalar_select %p119, %s120, %s121
      %p125 = pneg %p119
      %p126 = scmp.eq.s32.totalorder %s41, 15
      %p127 = por %p125, %p126
      %p128 = scmp.ne.s32.totalorder %s120, %s123
      %p129 = scmp.eq.s32.totalorder %s41, 0
      %p130 = por %p128, %p129
      %p131 = scmp.ne.s32.totalorder %s120, %s123
      %p132 = scmp.eq.s32.totalorder %s46, 15
      %p133 = por %p131, %p132
      %p134 = scmp.ne.s32.totalorder %s123, %s124
      %p135 = scmp.eq.s32.totalorder %s46, 0
      %p136 = por %p134, %p135
      %p137 = scmp.ne.s32.totalorder %s123, %s124
      %p138 = scmp.eq.s32.totalorder %s47, 15
      %p139 = por %p137, %p138
      %p141 = scmp.ne.s32.totalorder %s124, %s140
      %p142 = scmp.eq.s32.totalorder %s47, 0
      %p143 = por %p141, %p142
      %p144 = scmp.eq.s32.totalorder %s48, 3
      %s145 = scalar_select %p144, %s49, 0
      %p146 = scmp.eq.s32.totalorder %s67, 3
      %s147 = scalar_select %p146, %s63, 0
      %s148 = ssub.s32 %s145, %s147
      %p149 = scmp.eq.s32.totalorder %s148, 0
      %s151 = sadd.s32 %s150, 1
      %s152 = scalar_select %p149, %s150, %s151
      %p155 = pneg %p149
      %p156 = scmp.eq.s32.totalorder %s41, 15
      %p157 = por %p155, %p156
      %p158 = scmp.ne.s32.totalorder %s150, %s153
      %p159 = scmp.eq.s32.totalorder %s41, 0
      %p160 = por %p158, %p159
      %p161 = scmp.ne.s32.totalorder %s150, %s153
      %p162 = scmp.eq.s32.totalorder %s46, 15
      %p163 = por %p161, %p162
      %p164 = scmp.ne.s32.totalorder %s153, %s154
      %p165 = scmp.eq.s32.totalorder %s46, 0
      %p166 = por %p164, %p165
      %p167 = scmp.ne.s32.totalorder %s153, %s154
      %p168 = scmp.eq.s32.totalorder %s47, 15
      %p169 = por %p167, %p168
      %p171 = scmp.ne.s32.totalorder %s154, %s170
      %p172 = scmp.eq.s32.totalorder %s47, 0
      %p173 = por %p171, %p172
      %s175 = sadd.s32 %s174, 1
      %p178 = scmp.eq.s32.totalorder %s41, 15
      %p179 = scmp.ne.s32.totalorder %s174, %s176
      %p180 = scmp.eq.s32.totalorder %s41, 0
      %p181 = por %p179, %p180
      %p182 = scmp.ne.s32.totalorder %s174, %s176
      %p183 = scmp.eq.s32.totalorder %s46, 15
      %p184 = por %p182, %p183
      %p185 = scmp.ne.s32.totalorder %s176, %s177
      %p186 = scmp.eq.s32.totalorder %s46, 0
      %p187 = por %p185, %p186
      %p188 = scmp.ne.s32.totalorder %s176, %s177
      %p189 = scmp.eq.s32.totalorder %s47, 15
      %p190 = por %p188, %p189
      %p192 = scmp.ne.s32.totalorder %s177, %s191
      %p193 = scmp.eq.s32.totalorder %s47, 0
      %p194 = por %p192, %p193
      %s196 = sadd.s32 %s195, 1
      %p199 = scmp.eq.s32.totalorder %s41, 15
      %p200 = scmp.ne.s32.totalorder %s195, %s197
      %p201 = scmp.eq.s32.totalorder %s41, 0
      %p202 = por %p200, %p201
      %p203 = scmp.ne.s32.totalorder %s195, %s197
      %p204 = scmp.eq.s32.totalorder %s46, 15
      %p205 = por %p203, %p204
      %p206 = scmp.ne.s32.totalorder %s197, %s198
      %p207 = scmp.eq.s32.totalorder %s46, 0
      %p208 = por %p206, %p207
      %p209 = scmp.ne.s32.totalorder %s197, %s198
      %p210 = scmp.eq.s32.totalorder %s47, 15
      %p211 = por %p209, %p210
      %p213 = scmp.ne.s32.totalorder %s198, %s212
      %p214 = scmp.eq.s32.totalorder %s47, 0
      %p215 = por %p213, %p214
      %s217 = sadd.s32 %s216, 1
      %p220 = scmp.eq.s32.totalorder %s41, 15
      %p221 = scmp.ne.s32.totalorder %s216, %s218
      %p222 = scmp.eq.s32.totalorder %s41, 0
      %p223 = por %p221, %p222
      %p224 = scmp.ne.s32.totalorder %s216, %s218
      %p225 = scmp.eq.s32.totalorder %s46, 15
      %p226 = por %p224, %p225
      %p227 = scmp.ne.s32.totalorder %s218, %s219
      %p228 = scmp.eq.s32.totalorder %s46, 0
      %p229 = por %p227, %p228
      %p230 = scmp.ne.s32.totalorder %s218, %s219
      %p231 = scmp.eq.s32.totalorder %s47, 15
      %p232 = por %p230, %p231
      %p234 = scmp.ne.s32.totalorder %s219, %s233
      %p235 = scmp.eq.s32.totalorder %s47, 0
      %p236 = por %p234, %p235
      %s238 = sadd.s32 %s237, 1
      %p241 = scmp.eq.s32.totalorder %s41, 15
      %p242 = scmp.ne.s32.totalorder %s237, %s239
      %p243 = scmp.eq.s32.totalorder %s41, 0
      %p244 = por %p242, %p243
      %p245 = scmp.ne.s32.totalorder %s237, %s239
      %p246 = scmp.eq.s32.totalorder %s46, 15
      %p247 = por %p245, %p246
      %p248 = scmp.ne.s32.totalorder %s239, %s240
      %p249 = scmp.eq.s32.totalorder %s46, 0
      %p250 = por %p248, %p249
      %p251 = scmp.ne.s32.totalorder %s239, %s240
      %p252 = scmp.eq.s32.totalorder %s47, 15
      %p253 = por %p251, %p252
      %p255 = scmp.ne.s32.totalorder %s240, %s254
      %p256 = scmp.eq.s32.totalorder %s47, 0
      %p257 = por %p255, %p256
      %s259 = sadd.s32 %s258, 1
      %p262 = scmp.eq.s32.totalorder %s41, 15
      %p263 = scmp.ne.s32.totalorder %s258, %s260
      %p264 = scmp.eq.s32.totalorder %s41, 0
      %p265 = por %p263, %p264
      %p266 = scmp.ne.s32.totalorder %s258, %s260
      %p267 = scmp.eq.s32.totalorder %s46, 15
      %p268 = por %p266, %p267
      %p269 = scmp.ne.s32.totalorder %s260, %s261
      %p270 = scmp.eq.s32.totalorder %s46, 0
      %p271 = por %p269, %p270
      %p272 = scmp.ne.s32.totalorder %s260, %s261
      %p273 = scmp.eq.s32.totalorder %s47, 15
      %p274 = por %p272, %p273
      %p276 = scmp.ne.s32.totalorder %s261, %s275
      %p277 = scmp.eq.s32.totalorder %s47, 0
      %p278 = por %p276, %p277
      %s280 = sadd.s32 %s279, 1
      %p283 = scmp.eq.s32.totalorder %s41, 15
      %p284 = scmp.ne.s32.totalorder %s279, %s281
      %p285 = scmp.eq.s32.totalorder %s41, 0
      %p286 = por %p284, %p285
      %p287 = scmp.ne.s32.totalorder %s279, %s281
      %p288 = scmp.eq.s32.totalorder %s46, 15
      %p289 = por %p287, %p288
      %p290 = scmp.ne.s32.totalorder %s281, %s282
      %p291 = scmp.eq.s32.totalorder %s46, 0
      %p292 = por %p290, %p291
      %p293 = scmp.ne.s32.totalorder %s281, %s282
      %p294 = scmp.eq.s32.totalorder %s47, 15
      %p295 = por %p293, %p294
      %p297 = scmp.ne.s32.totalorder %s282, %s296
      %p298 = scmp.eq.s32.totalorder %s47, 0
      %p299 = por %p297, %p298
      %s301 = sadd.s32 %s300, 1
      %p304 = scmp.eq.s32.totalorder %s41, 15
      %p305 = scmp.ne.s32.totalorder %s300, %s302
      %p306 = scmp.eq.s32.totalorder %s41, 0
      %p307 = por %p305, %p306
      %p308 = scmp.ne.s32.totalorder %s300, %s302
      %p309 = scmp.eq.s32.totalorder %s46, 15
      %p310 = por %p308, %p309
      %p311 = scmp.ne.s32.totalorder %s302, %s303
      %p312 = scmp.eq.s32.totalorder %s46, 0
      %p313 = por %p311, %p312
      %p314 = scmp.ne.s32.totalorder %s302, %s303
      %p315 = scmp.eq.s32.totalorder %s47, 15
      %p316 = por %p314, %p315
      %p318 = scmp.ne.s32.totalorder %s303, %s317
      %p319 = scmp.eq.s32.totalorder %s47, 0
      %p320 = por %p318, %p319
      %s322 = sadd.s32 %s321, 1
      %p325 = scmp.eq.s32.totalorder %s41, 15
      %p326 = scmp.ne.s32.totalorder %s321, %s323
      %p327 = scmp.eq.s32.totalorder %s41, 0
      %p328 = por %p326, %p327
      %p329 = scmp.ne.s32.totalorder %s321, %s323
      %p330 = scmp.eq.s32.totalorder %s46, 15
      %p331 = por %p329, %p330
      %p332 = scmp.ne.s32.totalorder %s323, %s324
      %p333 = scmp.eq.s32.totalorder %s46, 0
      %p334 = por %p332, %p333
      %p335 = scmp.ne.s32.totalorder %s323, %s324
      %p336 = scmp.eq.s32.totalorder %s47, 15
      %p337 = por %p335, %p336
      %p339 = scmp.ne.s32.totalorder %s324, %s338
      %p340 = scmp.eq.s32.totalorder %s47, 0
      %p341 = por %p339, %p340
      %p342 = scmp.le.s32.totalorder 1, %s41
      %p343 = scmp.lt.s32.totalorder %s41, 17
      %p344 = pnand %p342, %p343
      %p345 = pneg %p344
      // Predicated region
      $region9: #{tpu_custom_call.1} parent=5 // pred_check
        _
      $region10: #{tpu_custom_call.1} parent=5 // pred_check_branch
        %347 = sbr.rel (%p344) target = $region12
      $region11: #{tpu_custom_call.1} parent=5 // pred_region
        %s348 = ssub.s32 %s41, 1
        // Predicated region
        $region13: #{tpu_custom_call.1} parent=11 // pred_check
          %p349 = pneg %p187
        $region14: #{tpu_custom_call.1} parent=11 // pred_check_branch
          %351 = sbr.rel (%p349) target = $region16
        $region15: #{tpu_custom_call.1} parent=11 // pred_region
          %353 = vsyncadd [#allocation17], 0
          %s354 = sshll.u32 %s5, 4
          %s355 = int_to_ptr.hbm [resolvable:$true] %s354
          %s356 = sshll.u32 [#allocation16], 4
          %s357 = int_to_ptr.vmem [resolvable:$true] %s356
          %362 = dma.hbm_to_vmem [thread:$0]  %s355, 1536, %s357, [#allocation17], 128, 128, 8
        $region16: #{tpu_custom_call.1} parent=11 // pred_fallthru
          _
        // Predicated region
        $region17: #{tpu_custom_call.1} parent=11 // pred_check
          %p363 = pneg %p208
        $region18: #{tpu_custom_call.1} parent=11 // pred_check_branch
          %365 = sbr.rel (%p363) target = $region20
        $region19: #{tpu_custom_call.1} parent=11 // pred_region
          %367 = vsyncadd [#allocation17], 0
          %s369 = sshll.u32 %s6, 4
          %s370 = int_to_ptr.hbm [resolvable:$true] %s369
          %s371 = sshll.u32 [#allocation18], 4
          %s372 = int_to_ptr.vmem [resolvable:$true] %s371
          %374 = dma.hbm_to_vmem [thread:$0]  %s370, 128, %s372, [#allocation17]
        $region20: #{tpu_custom_call.1} parent=11 // pred_fallthru
          _
        // Predicated region
        $region21: #{tpu_custom_call.1} parent=11 // pred_check
          %p375 = pneg %p229
        $region22: #{tpu_custom_call.1} parent=11 // pred_check_branch
          %377 = sbr.rel (%p375) target = $region24
        $region23: #{tpu_custom_call.1} parent=11 // pred_region
          %379 = vsyncadd [#allocation20], 0
          %s380 = sshll.u32 %s7, 4
          %s381 = int_to_ptr.hbm [resolvable:$true] %s380
          %s382 = sshll.u32 [#allocation19], 4
          %s383 = int_to_ptr.vmem [resolvable:$true] %s382
          %388 = dma.hbm_to_vmem [thread:$0]  %s381, 2048, %s383, [#allocation20], 128, 128, 8
        $region24: #{tpu_custom_call.1} parent=11 // pred_fallthru
          _
        // Predicated region
        $region25: #{tpu_custom_call.1} parent=11 // pred_check
          %p389 = pneg %p250
        $region26: #{tpu_custom_call.1} parent=11 // pred_check_branch
          %391 = sbr.rel (%p389) target = $region28
        $region27: #{tpu_custom_call.1} parent=11 // pred_region
          %393 = vsyncadd [#allocation20], 0
          %s394 = sshll.u32 %s8, 4
          %s395 = int_to_ptr.hbm [resolvable:$true] %s394
          %s396 = sshll.u32 [#allocation21], 4
          %s397 = int_to_ptr.vmem [resolvable:$true] %s396
          %402 = dma.hbm_to_vmem [thread:$0]  %s395, 1024, %s397, [#allocation20], 64, 64, 4
        $region28: #{tpu_custom_call.1} parent=11 // pred_fallthru
          _
        // Predicated region
        $region29: #{tpu_custom_call.1} parent=11 // pred_check
          %p403 = pneg %p271
        $region30: #{tpu_custom_call.1} parent=11 // pred_check_branch
          %405 = sbr.rel (%p403) target = $region32
        $region31: #{tpu_custom_call.1} parent=11 // pred_region
          %407 = vsyncadd [#allocation23], 0
          %s408 = sshll.u32 %s9, 4
          %s409 = int_to_ptr.hbm [resolvable:$true] %s408
          %s410 = sshll.u32 [#allocation22], 4
          %s411 = int_to_ptr.vmem [resolvable:$true] %s410
          %416 = dma.hbm_to_vmem [thread:$0]  %s409, 2048, %s411, [#allocation23], 128, 128, 8
        $region32: #{tpu_custom_call.1} parent=11 // pred_fallthru
          _
        // Predicated region
        $region33: #{tpu_custom_call.1} parent=11 // pred_check
          %p417 = pneg %p292
        $region34: #{tpu_custom_call.1} parent=11 // pred_check_branch
          %419 = sbr.rel (%p417) target = $region36
        $region35: #{tpu_custom_call.1} parent=11 // pred_region
          %421 = vsyncadd [#allocation23], 0
          %s422 = sshll.u32 %s10, 4
          %s423 = int_to_ptr.hbm [resolvable:$true] %s422
          %s424 = sshll.u32 [#allocation24], 4
          %s425 = int_to_ptr.vmem [resolvable:$true] %s424
          %430 = dma.hbm_to_vmem [thread:$0]  %s423, 1024, %s425, [#allocation23], 64, 64, 4
        $region36: #{tpu_custom_call.1} parent=11 // pred_fallthru
          _
        // Predicated region
        $region37: #{tpu_custom_call.1} parent=11 // pred_check
          %p431 = pneg %p313
        $region38: #{tpu_custom_call.1} parent=11 // pred_check_branch
          %433 = sbr.rel (%p431) target = $region40
        $region39: #{tpu_custom_call.1} parent=11 // pred_region
          _
        $region40: #{tpu_custom_call.1} parent=11 // pred_fallthru
          _
      $region12: #{tpu_custom_call.1} parent=5 // pred_fallthru
        _
      %p434 = scmp.lt.s32.totalorder %s41, 16
      // Predicated region
      $region41: #{tpu_custom_call.1} parent=5 // pred_check
        %p435 = pneg %p434
      $region42: #{tpu_custom_call.1} parent=5 // pred_check_branch
        %437 = sbr.rel (%p435) target = $region44
      $region43: #{tpu_custom_call.1} parent=5 // pred_region
        // Predicated region
        $region45: #{tpu_custom_call.1} parent=43 // pred_check
          %p438 = pneg %p84
        $region46: #{tpu_custom_call.1} parent=43 // pred_check_branch
          %440 = sbr.rel (%p438) target = $region48
        $region47: #{tpu_custom_call.1} parent=43 // pred_region
          %s441 = sand.u32 %s74, 1
          %s442 = scalar_lea.sflag [#allocation11], %s441
          %s443 = sand.u32 %s74, 1
          %s444 = smul.addr %s443, 128
          %s445 = scalar_lea.vmem [#allocation10], %s444
          %p446 = scmp.eq.s32.totalorder %s48, 0
          %s447 = scalar_select %p446, %s49, 0
          %s448 = smul.u32 16, %s447
          %450 = vsyncadd %s442, 0
          %s451 = smul.addr %s448, 8
          %s452 = scalar_lea.hbm %s2, %s451
          %s453 = sshll.u32 %s452, 4
          %s454 = int_to_ptr.hbm [resolvable:$true] %s453
          %s455 = sshll.u32 %s445, 4
          %s456 = int_to_ptr.vmem [resolvable:$true] %s455
          %461 = dma.hbm_to_vmem [thread:$0]  %s454, 2048, %s456, %s442, 128, 128, 8
        $region48: #{tpu_custom_call.1} parent=43 // pred_fallthru
          _
        // Predicated region
        $region49: #{tpu_custom_call.1} parent=43 // pred_check
          %p462 = pneg %p130
        $region50: #{tpu_custom_call.1} parent=43 // pred_check_branch
          %464 = sbr.rel (%p462) target = $region52
        $region51: #{tpu_custom_call.1} parent=43 // pred_region
          %s465 = sand.u32 %s41, 1
          %s466 = scalar_lea.sflag [#allocation14], %s465
          %s467 = sand.u32 %s120, 1
          %s468 = smul.addr %s467, 64
          %s469 = scalar_lea.vmem [#allocation13], %s468
          %p470 = scmp.ge.s32.totalorder %s48, 1
          %p471 = scmp.le.s32.totalorder %s48, 2
          %p472 = pnand %p470, %p471
          %p473 = pneg %p472
          %s474 = scalar_select %p473, %s49, 0
          %s475 = smul.u32 %s49, 2
          %s476 = sadd.s32 %s475, %s50
          %s477 = sld [smem:[#allocation8 + %s476]]
          %s478 = scalar_select %p473, %s477, 0
          %s479 = smul.u32 16, %s474
          %481 = vsyncadd %s466, 0
          %s482 = smul.addr %s479, 2
          %s483 = sadd.s32 %s478, %s482
          %s484 = smul.addr %s483, 4
          %s485 = scalar_lea.hbm %s3, %s484
          %s486 = sshll.u32 %s485, 4
          %s487 = int_to_ptr.hbm [resolvable:$true] %s486
          %s488 = sshll.u32 %s469, 4
          %s489 = int_to_ptr.vmem [resolvable:$true] %s488
          %494 = dma.hbm_to_vmem [thread:$0]  %s487, 1024, %s489, %s466, 128, 64, 4
        $region52: #{tpu_custom_call.1} parent=43 // pred_fallthru
          _
        // Predicated region
        $region53: #{tpu_custom_call.1} parent=43 // pred_check
          %p495 = pneg %p160
        $region54: #{tpu_custom_call.1} parent=43 // pred_check_branch
          %497 = sbr.rel (%p495) target = $region56
        $region55: #{tpu_custom_call.1} parent=43 // pred_region
          %s498 = sand.u32 %s41, 1
          %s499 = scalar_lea.sflag [#allocation14], %s498
          %s500 = sand.u32 %s150, 1
          %s501 = smul.addr %s500, 48
          %s502 = scalar_lea.vmem [#allocation15], %s501
          %p503 = scmp.eq.s32.totalorder %s48, 3
          %s504 = scalar_select %p503, %s49, 0
          %506 = vsyncadd %s499, 0
          %s507 = smul.addr %s504, 4
          %s508 = scalar_lea.hbm %s4, %s507
          %s509 = sshll.u32 %s508, 4
          %s510 = int_to_ptr.hbm [resolvable:$true] %s509
          %s511 = sshll.u32 %s502, 4
          %s512 = int_to_ptr.vmem [resolvable:$true] %s511
          %517 = dma.hbm_to_vmem [thread:$0]  %s510, 768, %s512, %s499, 128, 64, 4
        $region56: #{tpu_custom_call.1} parent=43 // pred_fallthru
          _
      $region44: #{tpu_custom_call.1} parent=5 // pred_fallthru
        _
      %p518 = scmp.le.s32.totalorder 1, %s41
      %p519 = scmp.lt.s32.totalorder %s41, 17
      %p520 = pnand %p518, %p519
      %p521 = pneg %p520
      // Predicated region
      $region57: #{tpu_custom_call.1} parent=5 // pred_check
        _
      $region58: #{tpu_custom_call.1} parent=5 // pred_check_branch
        %523 = sbr.rel (%p520) target = $region60
      $region59: #{tpu_custom_call.1} parent=5 // pred_region
        %s524 = ssub.s32 %s41, 1
        %s525 = sand.u32 %s77, 1
        %s526 = scalar_lea.sflag [#allocation11], %s525
        %s527 = sand.u32 %s77, 1
        %s528 = smul.addr %s527, 128
        %s529 = scalar_lea.vmem [#allocation10], %s528
        // Predicated region
        $region61: #{tpu_custom_call.1} parent=59 // pred_check
          %p530 = pneg %p90
        $region62: #{tpu_custom_call.1} parent=59 // pred_check_branch
          %532 = sbr.rel (%p530) target = $region64
        $region63: #{tpu_custom_call.1} parent=59 // pred_region
          %534 = dma.done %s526, 2048
        $region64: #{tpu_custom_call.1} parent=59 // pred_fallthru
          _
        %s535 = sand.u32 %s46, 1
        %s536 = scalar_lea.sflag [#allocation14], %s535
        %s537 = sand.u32 %s123, 1
        %s538 = smul.addr %s537, 64
        %s539 = scalar_lea.vmem [#allocation13], %s538
        // Predicated region
        $region65: #{tpu_custom_call.1} parent=59 // pred_check
          %p540 = pneg %p136
        $region66: #{tpu_custom_call.1} parent=59 // pred_check_branch
          %542 = sbr.rel (%p540) target = $region68
        $region67: #{tpu_custom_call.1} parent=59 // pred_region
          %544 = dma.done %s536, 1024
        $region68: #{tpu_custom_call.1} parent=59 // pred_fallthru
          _
        %s545 = sand.u32 %s46, 1
        %s546 = scalar_lea.sflag [#allocation14], %s545
        %s547 = sand.u32 %s153, 1
        %s548 = smul.addr %s547, 48
        %s549 = scalar_lea.vmem [#allocation15], %s548
        // Predicated region
        $region69: #{tpu_custom_call.1} parent=59 // pred_check
          %p550 = pneg %p166
        $region70: #{tpu_custom_call.1} parent=59 // pred_check_branch
          %552 = sbr.rel (%p550) target = $region72
        $region71: #{tpu_custom_call.1} parent=59 // pred_region
          %554 = dma.done %s546, 768
        $region72: #{tpu_custom_call.1} parent=59 // pred_fallthru
          _
        // Predicated region
        $region73: #{tpu_custom_call.1} parent=59 // pred_check
          %p555 = pneg %p187
        $region74: #{tpu_custom_call.1} parent=59 // pred_check_branch
          %557 = sbr.rel (%p555) target = $region76
        $region75: #{tpu_custom_call.1} parent=59 // pred_region
          %559 = dma.done [#allocation17], 1536
        $region76: #{tpu_custom_call.1} parent=59 // pred_fallthru
          _
        // Predicated region
        $region77: #{tpu_custom_call.1} parent=59 // pred_check
          %p560 = pneg %p208
        $region78: #{tpu_custom_call.1} parent=59 // pred_check_branch
          %562 = sbr.rel (%p560) target = $region80
        $region79: #{tpu_custom_call.1} parent=59 // pred_region
          %564 = dma.done [#allocation17], 128
        $region80: #{tpu_custom_call.1} parent=59 // pred_fallthru
          _
        // Predicated region
        $region81: #{tpu_custom_call.1} parent=59 // pred_check
          %p565 = pneg %p229
        $region82: #{tpu_custom_call.1} parent=59 // pred_check_branch
          %567 = sbr.rel (%p565) target = $region84
        $region83: #{tpu_custom_call.1} parent=59 // pred_region
          %569 = dma.done [#allocation20], 2048
        $region84: #{tpu_custom_call.1} parent=59 // pred_fallthru
          _
        // Predicated region
        $region85: #{tpu_custom_call.1} parent=59 // pred_check
          %p570 = pneg %p250
        $region86: #{tpu_custom_call.1} parent=59 // pred_check_branch
          %572 = sbr.rel (%p570) target = $region88
        $region87: #{tpu_custom_call.1} parent=59 // pred_region
          %574 = dma.done [#allocation20], 1024
        $region88: #{tpu_custom_call.1} parent=59 // pred_fallthru
          _
        // Predicated region
        $region89: #{tpu_custom_call.1} parent=59 // pred_check
          %p575 = pneg %p271
        $region90: #{tpu_custom_call.1} parent=59 // pred_check_branch
          %577 = sbr.rel (%p575) target = $region92
        $region91: #{tpu_custom_call.1} parent=59 // pred_region
          %579 = dma.done [#allocation23], 2048
        $region92: #{tpu_custom_call.1} parent=59 // pred_fallthru
          _
        // Predicated region
        $region93: #{tpu_custom_call.1} parent=59 // pred_check
          %p580 = pneg %p292
        $region94: #{tpu_custom_call.1} parent=59 // pred_check_branch
          %582 = sbr.rel (%p580) target = $region96
        $region95: #{tpu_custom_call.1} parent=59 // pred_region
          %584 = dma.done [#allocation23], 1024
        $region96: #{tpu_custom_call.1} parent=59 // pred_fallthru
          _
        %s585 = sand.u32 %s77, 1
        %s586 = scalar_lea.sflag [#allocation11], %s585
        %s587 = sand.u32 %s77, 1
        %s588 = smul.addr %s587, 128
        %s589 = scalar_lea.vmem [#allocation10], %s588
        %p590 = pneg %p90
        %p591 = pneg %p87
        %s592 = sand.u32 %s46, 1
        %s593 = scalar_lea.sflag [#allocation14], %s592
        %s594 = sand.u32 %s123, 1
        %s595 = smul.addr %s594, 64
        %s596 = scalar_lea.vmem [#allocation13], %s595
        %p597 = pneg %p136
        %p598 = pneg %p133
        %s599 = sand.u32 %s46, 1
        %s600 = scalar_lea.sflag [#allocation14], %s599
        %s601 = sand.u32 %s153, 1
        %s602 = smul.addr %s601, 48
        %s603 = scalar_lea.vmem [#allocation15], %s602
        %p604 = pneg %p166
        %p605 = pneg %p163
        %p606 = pneg %p187
        %p607 = pneg %p184
        %p608 = pneg %p208
        %p609 = pneg %p205
        %p610 = pneg %p229
        %p611 = pneg %p226
        %p612 = pneg %p250
        %p613 = pneg %p247
        %p614 = pneg %p271
        %p615 = pneg %p268
        %p616 = pneg %p292
        %p617 = pneg %p289
        %p618 = pneg %p313
        %p619 = pneg %p310
        %p620 = pneg %p334
        %p621 = pneg %p331
        %p622 = scmp.eq.s32.totalorder %s51, 0
        %s623 = scalar_select %p622, %s52, 0
        %s624 = smul.u32 16, %s623
        %p625 = scmp.ge.s32.totalorder %s51, 1
        %p626 = scmp.le.s32.totalorder %s51, 2
        %p627 = pnand %p625, %p626
        %p628 = pneg %p627
        %s629 = scalar_select %p628, %s52, 0
        %s630 = smul.u32 %s52, 2
        %s631 = sadd.s32 %s630, %s53
        %s632 = sld [smem:[#allocation8 + %s631]]
        %s633 = scalar_select %p628, %s632, 0
        %s634 = smul.u32 16, %s629
        %p635 = scmp.eq.s32.totalorder %s51, 3
        %s636 = scalar_select %p635, %s52, 0
        %s637 = smul.u32 %s52, 128
        %p638 = scmp.ge.s32.totalorder %s51, 1
        %p639 = scmp.le.s32.totalorder %s51, 2
        %p640 = pnand %p638, %p639
        %p641 = pneg %p640
        %p642 = scmp.eq.s32.totalorder %s51, 0
        %p643 = scmp.eq.s32.totalorder %s52, 0
        %p644 = pnand %p642, %p643
        %p645 = pneg %p644
        %p646 = scmp.eq.s32.totalorder %s53, 0
        %p647 = pnand %p645, %p646
        %p648 = pneg %p647
        // Predicated region
        $region97: #{tpu_custom_call.1} parent=59 // pred_check
          _
        $region98: #{tpu_custom_call.1} parent=59 // pred_check_branch
          %650 = sbr.rel (%p647) target = $region100
        $region99: #{tpu_custom_call.1} parent=59 // pred_region
          %651 = vst [vmem:[#allocation25] sm:$0xff] 0.0
          %652 = vst [vmem:[#allocation6] sm:$0xff] 0.0
          %653 = vst [vmem:[#allocation6 + $0x8] sm:$0xff] 0.0
          %654 = vst [vmem:[#allocation6 + $0x10] sm:$0xff] 0.0
          %655 = vst [vmem:[#allocation6 + $0x18] sm:$0xff] 0.0
          %656 = vst [vmem:[#allocation6 + $0x20] sm:$0xff] 0.0
          %657 = vst [vmem:[#allocation6 + $0x28] sm:$0xff] 0.0
          %658 = vst [vmem:[#allocation6 + $0x30] sm:$0xff] 0.0
          %659 = vst [vmem:[#allocation6 + $0x38] sm:$0xff] 0.0
          %660 = vst [vmem:[#allocation6 + $0x40] sm:$0xff] 0.0
          %661 = vst [vmem:[#allocation6 + $0x48] sm:$0xff] 0.0
          %662 = vst [vmem:[#allocation6 + $0x50] sm:$0xff] 0.0
          %663 = vst [vmem:[#allocation6 + $0x58] sm:$0xff] 0.0
        $region100: #{tpu_custom_call.1} parent=59 // pred_fallthru
          _
        %p664 = pnand %p642, %p646
        %p665 = pneg %p664
        // Predicated region
        $region101: #{tpu_custom_call.1} parent=59 // pred_check
          _
        $region102: #{tpu_custom_call.1} parent=59 // pred_check_branch
          %667 = sbr.rel (%p664) target = $region104
        $region103: #{tpu_custom_call.1} parent=59 // pred_region
          %v668 = vld [vmem:[%s529] sm:$0xff]
          %v669 = vld [vmem:[%s529 + $0x8] sm:$0xff]
          %v670 = vld [vmem:[%s529 + $0x10] sm:$0xff]
          %v671 = vld [vmem:[%s529 + $0x18] sm:$0xff]
          %v672 = vld [vmem:[%s529 + $0x20] sm:$0xff]
          %v673 = vld [vmem:[%s529 + $0x28] sm:$0xff]
          %v674 = vld [vmem:[%s529 + $0x30] sm:$0xff]
          %v675 = vld [vmem:[%s529 + $0x38] sm:$0xff]
          %v676 = vld [vmem:[%s529 + $0x40] sm:$0xff]
          %v677 = vld [vmem:[%s529 + $0x48] sm:$0xff]
          %v678 = vld [vmem:[%s529 + $0x50] sm:$0xff]
          %v679 = vld [vmem:[%s529 + $0x58] sm:$0xff]
          %v680 = vld [vmem:[%s529 + $0x60] sm:$0xff]
          %v681 = vld [vmem:[%s529 + $0x68] sm:$0xff]
          %v682 = vld [vmem:[%s529 + $0x70] sm:$0xff]
          %v683 = vld [vmem:[%s529 + $0x78] sm:$0xff]
          %v684 = vld [vmem:[#allocation19] sm:$0xff]
          %v685 = vld [vmem:[#allocation19 + $0x8] sm:$0xff]
          %v686 = vld [vmem:[#allocation19 + $0x10] sm:$0xff]
          %v687 = vld [vmem:[#allocation19 + $0x18] sm:$0xff]
          %v688 = vld [vmem:[#allocation19 + $0x20] sm:$0xff]
          %v689 = vld [vmem:[#allocation19 + $0x28] sm:$0xff]
          %v690 = vld [vmem:[#allocation19 + $0x30] sm:$0xff]
          %v691 = vld [vmem:[#allocation19 + $0x38] sm:$0xff]
          %v692 = vld [vmem:[#allocation19 + $0x40] sm:$0xff]
          %v693 = vld [vmem:[#allocation19 + $0x48] sm:$0xff]
          %v694 = vld [vmem:[#allocation19 + $0x50] sm:$0xff]
          %v695 = vld [vmem:[#allocation19 + $0x58] sm:$0xff]
          %v696 = vld [vmem:[#allocation19 + $0x60] sm:$0xff]
          %v697 = vld [vmem:[#allocation19 + $0x68] sm:$0xff]
          %v698 = vld [vmem:[#allocation19 + $0x70] sm:$0xff]
          %v699 = vld [vmem:[#allocation19 + $0x78] sm:$0xff]
          %700 = vmatpush.msra.mxu0 %v699
          %701 = vmatpush.msra.mxu0 %v698
          %702 = vmatpush.msra.mxu0 %v697
          %703 = vmatpush.msra.mxu0 %v696
          %704 = vmatpush.msra.mxu0 %v695
          %705 = vmatpush.msra.mxu0 %v694
          %706 = vmatpush.msra.mxu0 %v693
          %707 = vmatpush.msra.mxu0 %v692
          %708 = vmatpush.msra.mxu0 %v691
          %709 = vmatpush.msra.mxu0 %v690
          %710 = vmatpush.msra.mxu0 %v689
          %711 = vmatpush.msra.mxu0 %v688
          %712 = vmatpush.msra.mxu0 %v687
          %713 = vmatpush.msra.mxu0 %v686
          %714 = vmatpush.msra.mxu0 %v685
          %715 = vmatpush.msra.mxu0 %v684
          %716 = vmatmul.f32.gmra.mxu0 %v668
          %v717 = vpop.f32.mrf.mxu0
          %v718 = vadd.f32 0.0, %v717
          %719 = vmatmul.f32.gmra.mxu0 %v669
          %v720 = vpop.f32.mrf.mxu0
          %v721 = vadd.f32 0.0, %v720
          %722 = vmatmul.f32.gmra.mxu0 %v670
          %v723 = vpop.f32.mrf.mxu0
          %v724 = vadd.f32 0.0, %v723
          %725 = vmatmul.f32.gmra.mxu0 %v671
          %v726 = vpop.f32.mrf.mxu0
          %v727 = vadd.f32 0.0, %v726
          %728 = vmatmul.f32.gmra.mxu0 %v672
          %v729 = vpop.f32.mrf.mxu0
          %v730 = vadd.f32 0.0, %v729
          %731 = vmatmul.f32.gmra.mxu0 %v673
          %v732 = vpop.f32.mrf.mxu0
          %v733 = vadd.f32 0.0, %v732
          %734 = vmatmul.f32.gmra.mxu0 %v674
          %v735 = vpop.f32.mrf.mxu0
          %v736 = vadd.f32 0.0, %v735
          %737 = vmatmul.f32.gmra.mxu0 %v675
          %v738 = vpop.f32.mrf.mxu0
          %v739 = vadd.f32 0.0, %v738
          %740 = vmatmul.f32.gmra.mxu0 %v676
          %v741 = vpop.f32.mrf.mxu0
          %v742 = vadd.f32 0.0, %v741
          %743 = vmatmul.f32.gmra.mxu0 %v677
          %v744 = vpop.f32.mrf.mxu0
          %v745 = vadd.f32 0.0, %v744
          %746 = vmatmul.f32.gmra.mxu0 %v678
          %v747 = vpop.f32.mrf.mxu0
          %v748 = vadd.f32 0.0, %v747
          %749 = vmatmul.f32.gmra.mxu0 %v679
          %v750 = vpop.f32.mrf.mxu0
          %v751 = vadd.f32 0.0, %v750
          %752 = vmatmul.f32.gmra.mxu0 %v680
          %v753 = vpop.f32.mrf.mxu0
          %v754 = vadd.f32 0.0, %v753
          %755 = vmatmul.f32.gmra.mxu0 %v681
          %v756 = vpop.f32.mrf.mxu0
          %v757 = vadd.f32 0.0, %v756
          %758 = vmatmul.f32.gmra.mxu0 %v682
          %v759 = vpop.f32.mrf.mxu0
          %v760 = vadd.f32 0.0, %v759
          %761 = vmatmul.f32.gmra.mxu0 %v683
          %v762 = vpop.f32.mrf.mxu0
          %v763 = vadd.f32 0.0, %v762
          %764 = vdwg.mxu0
          %s765 = scalar_lea.vmem [#allocation2], %s637
          %766 = vst [vmem:[%s765] sm:$0xff] %v718
          %767 = vst [vmem:[%s765 + $0x8] sm:$0xff] %v721
          %768 = vst [vmem:[%s765 + $0x10] sm:$0xff] %v724
          %769 = vst [vmem:[%s765 + $0x18] sm:$0xff] %v727
          %770 = vst [vmem:[%s765 + $0x20] sm:$0xff] %v730
          %771 = vst [vmem:[%s765 + $0x28] sm:$0xff] %v733
          %772 = vst [vmem:[%s765 + $0x30] sm:$0xff] %v736
          %773 = vst [vmem:[%s765 + $0x38] sm:$0xff] %v739
          %774 = vst [vmem:[%s765 + $0x40] sm:$0xff] %v742
          %775 = vst [vmem:[%s765 + $0x48] sm:$0xff] %v745
          %776 = vst [vmem:[%s765 + $0x50] sm:$0xff] %v748
          %777 = vst [vmem:[%s765 + $0x58] sm:$0xff] %v751
          %778 = vst [vmem:[%s765 + $0x60] sm:$0xff] %v754
          %779 = vst [vmem:[%s765 + $0x68] sm:$0xff] %v757
          %780 = vst [vmem:[%s765 + $0x70] sm:$0xff] %v760
          %781 = vst [vmem:[%s765 + $0x78] sm:$0xff] %v763
          %v782 = vmax.f32 %v718, 0.0
          %v783 = vmax.f32 %v721, 0.0
          %v784 = vmax.f32 %v724, 0.0
          %v785 = vmax.f32 %v727, 0.0
          %v786 = vmax.f32 %v730, 0.0
          %v787 = vmax.f32 %v733, 0.0
          %v788 = vmax.f32 %v736, 0.0
          %v789 = vmax.f32 %v739, 0.0
          %v790 = vmax.f32 %v742, 0.0
          %v791 = vmax.f32 %v745, 0.0
          %v792 = vmax.f32 %v748, 0.0
          %v793 = vmax.f32 %v751, 0.0
          %v794 = vmax.f32 %v754, 0.0
          %v795 = vmax.f32 %v757, 0.0
          %v796 = vmax.f32 %v760, 0.0
          %v797 = vmax.f32 %v763, 0.0
          %v798 = vpack.c.bf16 %v782, %v782
          %v799 = vpack.c.bf16 %v783, %v783
          %v800 = vpack.c.bf16 %v784, %v784
          %v801 = vpack.c.bf16 %v785, %v785
          %v802 = vpack.c.bf16 %v786, %v786
          %v803 = vpack.c.bf16 %v787, %v787
          %v804 = vpack.c.bf16 %v788, %v788
          %v805 = vpack.c.bf16 %v789, %v789
          %v806 = vpack.c.bf16 %v790, %v790
          %v807 = vpack.c.bf16 %v791, %v791
          %v808 = vpack.c.bf16 %v792, %v792
          %v809 = vpack.c.bf16 %v793, %v793
          %v810 = vpack.c.bf16 %v794, %v794
          %v811 = vpack.c.bf16 %v795, %v795
          %v812 = vpack.c.bf16 %v796, %v796
          %v813 = vpack.c.bf16 %v797, %v797
          %s814 = sshra.s32 %s637, 3
          %s815 = sand.u32 %s637, 7
          %s816 = smul.addr %s814, 4
          %s817 = scalar_lea.vmem [#allocation3], %s816
          %818 = vst [vmem:[%s817] sm:$0xf] %v798
          %819 = vst [vmem:[%s817 + $0x4] sm:$0xf] %v799
          %820 = vst [vmem:[%s817 + $0x8] sm:$0xf] %v800
          %821 = vst [vmem:[%s817 + $0xc] sm:$0xf] %v801
          %822 = vst [vmem:[%s817 + $0x10] sm:$0xf] %v802
          %823 = vst [vmem:[%s817 + $0x14] sm:$0xf] %v803
          %824 = vst [vmem:[%s817 + $0x18] sm:$0xf] %v804
          %825 = vst [vmem:[%s817 + $0x1c] sm:$0xf] %v805
          %826 = vst [vmem:[%s817 + $0x20] sm:$0xf] %v806
          %827 = vst [vmem:[%s817 + $0x24] sm:$0xf] %v807
          %828 = vst [vmem:[%s817 + $0x28] sm:$0xf] %v808
          %829 = vst [vmem:[%s817 + $0x2c] sm:$0xf] %v809
          %830 = vst [vmem:[%s817 + $0x30] sm:$0xf] %v810
          %831 = vst [vmem:[%s817 + $0x34] sm:$0xf] %v811
          %832 = vst [vmem:[%s817 + $0x38] sm:$0xf] %v812
          %833 = vst [vmem:[%s817 + $0x3c] sm:$0xf] %v813
        $region104: #{tpu_custom_call.1} parent=59 // pred_fallthru
          _
        %p834 = pnand %p641, %p646
        %p835 = pneg %p834
        // Predicated region
        $region105: #{tpu_custom_call.1} parent=59 // pred_check
          _
        $region106: #{tpu_custom_call.1} parent=59 // pred_check_branch
          %837 = sbr.rel (%p834) target = $region108
        $region107: #{tpu_custom_call.1} parent=59 // pred_region
          %838 = vst [vmem:[#allocation5] sm:$0xff] 0.0
          %839 = vst [vmem:[#allocation5 + $0x8] sm:$0xff] 0.0
          %840 = vst [vmem:[#allocation5 + $0x10] sm:$0xff] 0.0
          %841 = vst [vmem:[#allocation5 + $0x18] sm:$0xff] 0.0
          %842 = vst [vmem:[#allocation5 + $0x20] sm:$0xff] 0.0
          %843 = vst [vmem:[#allocation5 + $0x28] sm:$0xff] 0.0
          %844 = vst [vmem:[#allocation5 + $0x30] sm:$0xff] 0.0
          %845 = vst [vmem:[#allocation5 + $0x38] sm:$0xff] 0.0
          %846 = vst [vmem:[#allocation5 + $0x40] sm:$0xff] 0.0
          %847 = vst [vmem:[#allocation5 + $0x48] sm:$0xff] 0.0
          %848 = vst [vmem:[#allocation5 + $0x50] sm:$0xff] 0.0
          %849 = vst [vmem:[#allocation5 + $0x58] sm:$0xff] 0.0
          %850 = vst [vmem:[#allocation5 + $0x60] sm:$0xff] 0.0
          %851 = vst [vmem:[#allocation5 + $0x68] sm:$0xff] 0.0
          %852 = vst [vmem:[#allocation5 + $0x70] sm:$0xff] 0.0
          %853 = vst [vmem:[#allocation5 + $0x78] sm:$0xff] 0.0
        $region108: #{tpu_custom_call.1} parent=59 // pred_fallthru
          _
        %p854 = scmp.lt.s32.totalorder %s51, 0
        %s855 = ssub.s32 0, %s51
        %s856 = scalar_select %p854, %s855, %s51
        %s857 = sand.u32 %s856, 1
        %s858 = ssub.s32 0, %s857
        %s859 = scalar_select %p854, %s858, %s857
        %p860 = scmp.ne.s32.totalorder %s859, 0
        %p861 = scmp.lt.s32.totalorder %s859, 0
        %p862 = pnand %p861, %p860
        %p863 = pneg %p862
        %s864 = sadd.s32 %s859, 2
        %s865 = scalar_select %p863, %s864, %s859
        %p866 = scmp.eq.s32.totalorder %s865, 1
        %s867 = sld [smem:[#allocation9 + %s52]]
        %p868 = scmp.lt.s32.totalorder %s53, %s867
        %p869 = scmp.eq.s32.totalorder %s53, 1
        %p870 = pnand %p641, %p866
        %p871 = pneg %p870
        %p872 = pnand %p871, %p868
        %p873 = pneg %p872
        // Predicated region
        $region109: #{tpu_custom_call.1} parent=59 // pred_check
          _
        $region110: #{tpu_custom_call.1} parent=59 // pred_check_branch
          %875 = sbr.rel (%p872) target = $region112
        $region111: #{tpu_custom_call.1} parent=59 // pred_region
          %s876 = smul.u32 %s52, 2
          %s877 = sadd.s32 %s876, %s53
          %s878 = sld [smem:[#allocation8 + %s877]]
          %s879 = smul.u32 %s878, 128
          %v880 = vld [vmem:[#allocation5] sm:$0xff]
          %v881 = vld [vmem:[#allocation5 + $0x8] sm:$0xff]
          %v882 = vld [vmem:[#allocation5 + $0x10] sm:$0xff]
          %v883 = vld [vmem:[#allocation5 + $0x18] sm:$0xff]
          %v884 = vld [vmem:[#allocation5 + $0x20] sm:$0xff]
          %v885 = vld [vmem:[#allocation5 + $0x28] sm:$0xff]
          %v886 = vld [vmem:[#allocation5 + $0x30] sm:$0xff]
          %v887 = vld [vmem:[#allocation5 + $0x38] sm:$0xff]
          %v888 = vld [vmem:[#allocation5 + $0x40] sm:$0xff]
          %v889 = vld [vmem:[#allocation5 + $0x48] sm:$0xff]
          %v890 = vld [vmem:[#allocation5 + $0x50] sm:$0xff]
          %v891 = vld [vmem:[#allocation5 + $0x58] sm:$0xff]
          %v892 = vld [vmem:[#allocation5 + $0x60] sm:$0xff]
          %v893 = vld [vmem:[#allocation5 + $0x68] sm:$0xff]
          %v894 = vld [vmem:[#allocation5 + $0x70] sm:$0xff]
          %v895 = vld [vmem:[#allocation5 + $0x78] sm:$0xff]
          %v896 = vld [vmem:[%s539] sm:$0xf]
          %v897 = vld [vmem:[%s539 + $0x4] sm:$0xf]
          %v898 = vld [vmem:[%s539 + $0x8] sm:$0xf]
          %v899 = vld [vmem:[%s539 + $0xc] sm:$0xf]
          %v900 = vld [vmem:[%s539 + $0x10] sm:$0xf]
          %v901 = vld [vmem:[%s539 + $0x14] sm:$0xf]
          %v902 = vld [vmem:[%s539 + $0x18] sm:$0xf]
          %v903 = vld [vmem:[%s539 + $0x1c] sm:$0xf]
          %v904 = vld [vmem:[%s539 + $0x20] sm:$0xf]
          %v905 = vld [vmem:[%s539 + $0x24] sm:$0xf]
          %v906 = vld [vmem:[%s539 + $0x28] sm:$0xf]
          %v907 = vld [vmem:[%s539 + $0x2c] sm:$0xf]
          %v908 = vld [vmem:[%s539 + $0x30] sm:$0xf]
          %v909 = vld [vmem:[%s539 + $0x34] sm:$0xf]
          %v910 = vld [vmem:[%s539 + $0x38] sm:$0xf]
          %v911 = vld [vmem:[%s539 + $0x3c] sm:$0xf]
          %s912 = sshra.s32 %s879, 3
          %s913 = sand.u32 %s879, 7
          %s914 = smul.addr %s912, 4
          %s915 = scalar_lea.vmem [#allocation3], %s914
          %v916 = vld [vmem:[%s915] sm:$0xf]
          %v917 = vld [vmem:[%s915 + $0x4] sm:$0xf]
          %v918 = vld [vmem:[%s915 + $0x8] sm:$0xf]
          %v919 = vld [vmem:[%s915 + $0xc] sm:$0xf]
          %v920 = vld [vmem:[%s915 + $0x10] sm:$0xf]
          %v921 = vld [vmem:[%s915 + $0x14] sm:$0xf]
          %v922 = vld [vmem:[%s915 + $0x18] sm:$0xf]
          %v923 = vld [vmem:[%s915 + $0x1c] sm:$0xf]
          %v924 = vld [vmem:[%s915 + $0x20] sm:$0xf]
          %v925 = vld [vmem:[%s915 + $0x24] sm:$0xf]
          %v926 = vld [vmem:[%s915 + $0x28] sm:$0xf]
          %v927 = vld [vmem:[%s915 + $0x2c] sm:$0xf]
          %v928 = vld [vmem:[%s915 + $0x30] sm:$0xf]
          %v929 = vld [vmem:[%s915 + $0x34] sm:$0xf]
          %v930 = vld [vmem:[%s915 + $0x38] sm:$0xf]
          %v931 = vld [vmem:[%s915 + $0x3c] sm:$0xf]
          %v948 = vunpack.c.l.b16 %v896
          %v949 = vunpack.c.l.b16 %v897
          %v950 = vunpack.c.l.b16 %v898
          %v951 = vunpack.c.l.b16 %v899
          %v952 = vunpack.c.l.b16 %v900
          %v953 = vunpack.c.l.b16 %v901
          %v954 = vunpack.c.l.b16 %v902
          %v955 = vunpack.c.l.b16 %v903
          %v956 = vunpack.c.l.b16 %v904
          %v957 = vunpack.c.l.b16 %v905
          %v958 = vunpack.c.l.b16 %v906
          %v959 = vunpack.c.l.b16 %v907
          %v960 = vunpack.c.l.b16 %v908
          %v961 = vunpack.c.l.b16 %v909
          %v962 = vunpack.c.l.b16 %v910
          %v963 = vunpack.c.l.b16 %v911
          %v964 = vpack.c.b16 %v949, %v948
          %v965 = vpack.c.b16 %v951, %v950
          %v966 = vpack.c.b16 %v953, %v952
          %v967 = vpack.c.b16 %v955, %v954
          %v968 = vpack.c.b16 %v957, %v956
          %v969 = vpack.c.b16 %v959, %v958
          %v970 = vpack.c.b16 %v961, %v960
          %v971 = vpack.c.b16 %v963, %v962
          %v996 = vunpack.c.l.b16 %v916
          %v997 = vunpack.c.l.b16 %v917
          %v998 = vunpack.c.l.b16 %v918
          %v999 = vunpack.c.l.b16 %v919
          %v1000 = vunpack.c.l.b16 %v920
          %v1001 = vunpack.c.l.b16 %v921
          %v1002 = vunpack.c.l.b16 %v922
          %v1003 = vunpack.c.l.b16 %v923
          %v1004 = vunpack.c.l.b16 %v924
          %v1005 = vunpack.c.l.b16 %v925
          %v1006 = vunpack.c.l.b16 %v926
          %v1007 = vunpack.c.l.b16 %v927
          %v1008 = vunpack.c.l.b16 %v928
          %v1009 = vunpack.c.l.b16 %v929
          %v1010 = vunpack.c.l.b16 %v930
          %v1011 = vunpack.c.l.b16 %v931
          %v1012 = vpack.c.b16 %v997, %v996
          %v1013 = vpack.c.b16 %v999, %v998
          %v1014 = vpack.c.b16 %v1001, %v1000
          %v1015 = vpack.c.b16 %v1003, %v1002
          %v1016 = vpack.c.b16 %v1005, %v1004
          %v1017 = vpack.c.b16 %v1007, %v1006
          %v1018 = vpack.c.b16 %v1009, %v1008
          %v1019 = vpack.c.b16 %v1011, %v1010
          %1028 = vmatpush.bf16.msra.mxu0 %v1019
          %1029 = vmatpush.bf16.msra.mxu0 %v1018
          %1030 = vmatpush.bf16.msra.mxu0 %v1017
          %1031 = vmatpush.bf16.msra.mxu0 %v1016
          %1032 = vmatpush.bf16.msra.mxu0 %v1015
          %1033 = vmatpush.bf16.msra.mxu0 %v1014
          %1034 = vmatpush.bf16.msra.mxu0 %v1013
          %1035 = vmatpush.bf16.msra.mxu0 %v1012
          %1036 = vmatmul.bf16.gmra.mxu0 %v964
          %v1037 = vpop.f32.mrf.mxu0
          %v1038 = vadd.f32 0.0, %v1037
          %v1039 = vpop.f32.mrf.mxu0
          %v1040 = vadd.f32 0.0, %v1039
          %1041 = vmatmul.bf16.gmra.mxu0 %v965
          %v1042 = vpop.f32.mrf.mxu0
          %v1043 = vadd.f32 0.0, %v1042
          %v1044 = vpop.f32.mrf.mxu0
          %v1045 = vadd.f32 0.0, %v1044
          %1046 = vmatmul.bf16.gmra.mxu0 %v966
          %v1047 = vpop.f32.mrf.mxu0
          %v1048 = vadd.f32 0.0, %v1047
          %v1049 = vpop.f32.mrf.mxu0
          %v1050 = vadd.f32 0.0, %v1049
          %1051 = vmatmul.bf16.gmra.mxu0 %v967
          %v1052 = vpop.f32.mrf.mxu0
          %v1053 = vadd.f32 0.0, %v1052
          %v1054 = vpop.f32.mrf.mxu0
          %v1055 = vadd.f32 0.0, %v1054
          %1056 = vmatmul.bf16.gmra.mxu0 %v968
          %v1057 = vpop.f32.mrf.mxu0
          %v1058 = vadd.f32 0.0, %v1057
          %v1059 = vpop.f32.mrf.mxu0
          %v1060 = vadd.f32 0.0, %v1059
          %1061 = vmatmul.bf16.gmra.mxu0 %v969
          %v1062 = vpop.f32.mrf.mxu0
          %v1063 = vadd.f32 0.0, %v1062
          %v1064 = vpop.f32.mrf.mxu0
          %v1065 = vadd.f32 0.0, %v1064
          %1066 = vmatmul.bf16.gmra.mxu0 %v970
          %v1067 = vpop.f32.mrf.mxu0
          %v1068 = vadd.f32 0.0, %v1067
          %v1069 = vpop.f32.mrf.mxu0
          %v1070 = vadd.f32 0.0, %v1069
          %1071 = vmatmul.bf16.gmra.mxu0 %v971
          %v1072 = vpop.f32.mrf.mxu0
          %v1073 = vadd.f32 0.0, %v1072
          %v1074 = vpop.f32.mrf.mxu0
          %v1075 = vadd.f32 0.0, %v1074
          %1076 = vdwg.mxu0
          %v1077 = vadd.f32 %v880, %v1038
          %v1078 = vadd.f32 %v881, %v1040
          %v1079 = vadd.f32 %v882, %v1043
          %v1080 = vadd.f32 %v883, %v1045
          %v1081 = vadd.f32 %v884, %v1048
          %v1082 = vadd.f32 %v885, %v1050
          %v1083 = vadd.f32 %v886, %v1053
          %v1084 = vadd.f32 %v887, %v1055
          %v1085 = vadd.f32 %v888, %v1058
          %v1086 = vadd.f32 %v889, %v1060
          %v1087 = vadd.f32 %v890, %v1063
          %v1088 = vadd.f32 %v891, %v1065
          %v1089 = vadd.f32 %v892, %v1068
          %v1090 = vadd.f32 %v893, %v1070
          %v1091 = vadd.f32 %v894, %v1073
          %v1092 = vadd.f32 %v895, %v1075
          %1093 = vst [vmem:[#allocation5] sm:$0xff] %v1077
          %1094 = vst [vmem:[#allocation5 + $0x8] sm:$0xff] %v1078
          %1095 = vst [vmem:[#allocation5 + $0x10] sm:$0xff] %v1079
          %1096 = vst [vmem:[#allocation5 + $0x18] sm:$0xff] %v1080
          %1097 = vst [vmem:[#allocation5 + $0x20] sm:$0xff] %v1081
          %1098 = vst [vmem:[#allocation5 + $0x28] sm:$0xff] %v1082
          %1099 = vst [vmem:[#allocation5 + $0x30] sm:$0xff] %v1083
          %1100 = vst [vmem:[#allocation5 + $0x38] sm:$0xff] %v1084
          %1101 = vst [vmem:[#allocation5 + $0x40] sm:$0xff] %v1085
          %1102 = vst [vmem:[#allocation5 + $0x48] sm:$0xff] %v1086
          %1103 = vst [vmem:[#allocation5 + $0x50] sm:$0xff] %v1087
          %1104 = vst [vmem:[#allocation5 + $0x58] sm:$0xff] %v1088
          %1105 = vst [vmem:[#allocation5 + $0x60] sm:$0xff] %v1089
          %1106 = vst [vmem:[#allocation5 + $0x68] sm:$0xff] %v1090
          %1107 = vst [vmem:[#allocation5 + $0x70] sm:$0xff] %v1091
          %1108 = vst [vmem:[#allocation5 + $0x78] sm:$0xff] %v1092
        $region112: #{tpu_custom_call.1} parent=59 // pred_fallthru
          _
        %p1109 = scmp.ne.s32.totalorder %s865, 1
        %p1110 = pnand %p641, %p1109
        %p1111 = pneg %p1110
        %p1112 = pnand %p1111, %p868
        %p1113 = pneg %p1112
        // Predicated region
        $region113: #{tpu_custom_call.1} parent=59 // pred_check
          _
        $region114: #{tpu_custom_call.1} parent=59 // pred_check_branch
          %1115 = sbr.rel (%p1112) target = $region116
        $region115: #{tpu_custom_call.1} parent=59 // pred_region
          %s1116 = smul.u32 %s52, 2
          %s1117 = sadd.s32 %s1116, %s53
          %s1118 = sld [smem:[#allocation8 + %s1117]]
          %s1119 = smul.u32 %s1118, 128
          %v1120 = vld [vmem:[#allocation5] sm:$0xff]
          %v1121 = vld [vmem:[#allocation5 + $0x8] sm:$0xff]
          %v1122 = vld [vmem:[#allocation5 + $0x10] sm:$0xff]
          %v1123 = vld [vmem:[#allocation5 + $0x18] sm:$0xff]
          %v1124 = vld [vmem:[#allocation5 + $0x20] sm:$0xff]
          %v1125 = vld [vmem:[#allocation5 + $0x28] sm:$0xff]
          %v1126 = vld [vmem:[#allocation5 + $0x30] sm:$0xff]
          %v1127 = vld [vmem:[#allocation5 + $0x38] sm:$0xff]
          %v1128 = vld [vmem:[#allocation5 + $0x40] sm:$0xff]
          %v1129 = vld [vmem:[#allocation5 + $0x48] sm:$0xff]
          %v1130 = vld [vmem:[#allocation5 + $0x50] sm:$0xff]
          %v1131 = vld [vmem:[#allocation5 + $0x58] sm:$0xff]
          %v1132 = vld [vmem:[#allocation5 + $0x60] sm:$0xff]
          %v1133 = vld [vmem:[#allocation5 + $0x68] sm:$0xff]
          %v1134 = vld [vmem:[#allocation5 + $0x70] sm:$0xff]
          %v1135 = vld [vmem:[#allocation5 + $0x78] sm:$0xff]
          %v1136 = vld [vmem:[%s539] sm:$0xf]
          %v1137 = vld [vmem:[%s539 + $0x4] sm:$0xf]
          %v1138 = vld [vmem:[%s539 + $0x8] sm:$0xf]
          %v1139 = vld [vmem:[%s539 + $0xc] sm:$0xf]
          %v1140 = vld [vmem:[%s539 + $0x10] sm:$0xf]
          %v1141 = vld [vmem:[%s539 + $0x14] sm:$0xf]
          %v1142 = vld [vmem:[%s539 + $0x18] sm:$0xf]
          %v1143 = vld [vmem:[%s539 + $0x1c] sm:$0xf]
          %v1144 = vld [vmem:[%s539 + $0x20] sm:$0xf]
          %v1145 = vld [vmem:[%s539 + $0x24] sm:$0xf]
          %v1146 = vld [vmem:[%s539 + $0x28] sm:$0xf]
          %v1147 = vld [vmem:[%s539 + $0x2c] sm:$0xf]
          %v1148 = vld [vmem:[%s539 + $0x30] sm:$0xf]
          %v1149 = vld [vmem:[%s539 + $0x34] sm:$0xf]
          %v1150 = vld [vmem:[%s539 + $0x38] sm:$0xf]
          %v1151 = vld [vmem:[%s539 + $0x3c] sm:$0xf]
          %s1152 = sshra.s32 %s1119, 3
          %s1153 = sand.u32 %s1119, 7
          %s1154 = smul.addr %s1152, 4
          %s1155 = scalar_lea.vmem [#allocation4], %s1154
          %v1156 = vld [vmem:[%s1155] sm:$0xf]
          %v1157 = vld [vmem:[%s1155 + $0x4] sm:$0xf]
          %v1158 = vld [vmem:[%s1155 + $0x8] sm:$0xf]
          %v1159 = vld [vmem:[%s1155 + $0xc] sm:$0xf]
          %v1160 = vld [vmem:[%s1155 + $0x10] sm:$0xf]
          %v1161 = vld [vmem:[%s1155 + $0x14] sm:$0xf]
          %v1162 = vld [vmem:[%s1155 + $0x18] sm:$0xf]
          %v1163 = vld [vmem:[%s1155 + $0x1c] sm:$0xf]
          %v1164 = vld [vmem:[%s1155 + $0x20] sm:$0xf]
          %v1165 = vld [vmem:[%s1155 + $0x24] sm:$0xf]
          %v1166 = vld [vmem:[%s1155 + $0x28] sm:$0xf]
          %v1167 = vld [vmem:[%s1155 + $0x2c] sm:$0xf]
          %v1168 = vld [vmem:[%s1155 + $0x30] sm:$0xf]
          %v1169 = vld [vmem:[%s1155 + $0x34] sm:$0xf]
          %v1170 = vld [vmem:[%s1155 + $0x38] sm:$0xf]
          %v1171 = vld [vmem:[%s1155 + $0x3c] sm:$0xf]
          %v1188 = vunpack.c.l.b16 %v1136
          %v1189 = vunpack.c.l.b16 %v1137
          %v1190 = vunpack.c.l.b16 %v1138
          %v1191 = vunpack.c.l.b16 %v1139
          %v1192 = vunpack.c.l.b16 %v1140
          %v1193 = vunpack.c.l.b16 %v1141
          %v1194 = vunpack.c.l.b16 %v1142
          %v1195 = vunpack.c.l.b16 %v1143
          %v1196 = vunpack.c.l.b16 %v1144
          %v1197 = vunpack.c.l.b16 %v1145
          %v1198 = vunpack.c.l.b16 %v1146
          %v1199 = vunpack.c.l.b16 %v1147
          %v1200 = vunpack.c.l.b16 %v1148
          %v1201 = vunpack.c.l.b16 %v1149
          %v1202 = vunpack.c.l.b16 %v1150
          %v1203 = vunpack.c.l.b16 %v1151
          %v1204 = vpack.c.b16 %v1189, %v1188
          %v1205 = vpack.c.b16 %v1191, %v1190
          %v1206 = vpack.c.b16 %v1193, %v1192
          %v1207 = vpack.c.b16 %v1195, %v1194
          %v1208 = vpack.c.b16 %v1197, %v1196
          %v1209 = vpack.c.b16 %v1199, %v1198
          %v1210 = vpack.c.b16 %v1201, %v1200
          %v1211 = vpack.c.b16 %v1203, %v1202
          %v1236 = vunpack.c.l.b16 %v1156
          %v1237 = vunpack.c.l.b16 %v1157
          %v1238 = vunpack.c.l.b16 %v1158
          %v1239 = vunpack.c.l.b16 %v1159
          %v1240 = vunpack.c.l.b16 %v1160
          %v1241 = vunpack.c.l.b16 %v1161
          %v1242 = vunpack.c.l.b16 %v1162
          %v1243 = vunpack.c.l.b16 %v1163
          %v1244 = vunpack.c.l.b16 %v1164
          %v1245 = vunpack.c.l.b16 %v1165
          %v1246 = vunpack.c.l.b16 %v1166
          %v1247 = vunpack.c.l.b16 %v1167
          %v1248 = vunpack.c.l.b16 %v1168
          %v1249 = vunpack.c.l.b16 %v1169
          %v1250 = vunpack.c.l.b16 %v1170
          %v1251 = vunpack.c.l.b16 %v1171
          %v1252 = vpack.c.b16 %v1237, %v1236
          %v1253 = vpack.c.b16 %v1239, %v1238
          %v1254 = vpack.c.b16 %v1241, %v1240
          %v1255 = vpack.c.b16 %v1243, %v1242
          %v1256 = vpack.c.b16 %v1245, %v1244
          %v1257 = vpack.c.b16 %v1247, %v1246
          %v1258 = vpack.c.b16 %v1249, %v1248
          %v1259 = vpack.c.b16 %v1251, %v1250
          %1268 = vmatpush.bf16.msra.mxu0 %v1259
          %1269 = vmatpush.bf16.msra.mxu0 %v1258
          %1270 = vmatpush.bf16.msra.mxu0 %v1257
          %1271 = vmatpush.bf16.msra.mxu0 %v1256
          %1272 = vmatpush.bf16.msra.mxu0 %v1255
          %1273 = vmatpush.bf16.msra.mxu0 %v1254
          %1274 = vmatpush.bf16.msra.mxu0 %v1253
          %1275 = vmatpush.bf16.msra.mxu0 %v1252
          %1276 = vmatmul.bf16.gmra.mxu0 %v1204
          %v1277 = vpop.f32.mrf.mxu0
          %v1278 = vadd.f32 0.0, %v1277
          %v1279 = vpop.f32.mrf.mxu0
          %v1280 = vadd.f32 0.0, %v1279
          %1281 = vmatmul.bf16.gmra.mxu0 %v1205
          %v1282 = vpop.f32.mrf.mxu0
          %v1283 = vadd.f32 0.0, %v1282
          %v1284 = vpop.f32.mrf.mxu0
          %v1285 = vadd.f32 0.0, %v1284
          %1286 = vmatmul.bf16.gmra.mxu0 %v1206
          %v1287 = vpop.f32.mrf.mxu0
          %v1288 = vadd.f32 0.0, %v1287
          %v1289 = vpop.f32.mrf.mxu0
          %v1290 = vadd.f32 0.0, %v1289
          %1291 = vmatmul.bf16.gmra.mxu0 %v1207
          %v1292 = vpop.f32.mrf.mxu0
          %v1293 = vadd.f32 0.0, %v1292
          %v1294 = vpop.f32.mrf.mxu0
          %v1295 = vadd.f32 0.0, %v1294
          %1296 = vmatmul.bf16.gmra.mxu0 %v1208
          %v1297 = vpop.f32.mrf.mxu0
          %v1298 = vadd.f32 0.0, %v1297
          %v1299 = vpop.f32.mrf.mxu0
          %v1300 = vadd.f32 0.0, %v1299
          %1301 = vmatmul.bf16.gmra.mxu0 %v1209
          %v1302 = vpop.f32.mrf.mxu0
          %v1303 = vadd.f32 0.0, %v1302
          %v1304 = vpop.f32.mrf.mxu0
          %v1305 = vadd.f32 0.0, %v1304
          %1306 = vmatmul.bf16.gmra.mxu0 %v1210
          %v1307 = vpop.f32.mrf.mxu0
          %v1308 = vadd.f32 0.0, %v1307
          %v1309 = vpop.f32.mrf.mxu0
          %v1310 = vadd.f32 0.0, %v1309
          %1311 = vmatmul.bf16.gmra.mxu0 %v1211
          %v1312 = vpop.f32.mrf.mxu0
          %v1313 = vadd.f32 0.0, %v1312
          %v1314 = vpop.f32.mrf.mxu0
          %v1315 = vadd.f32 0.0, %v1314
          %1316 = vdwg.mxu0
          %v1317 = vadd.f32 %v1120, %v1278
          %v1318 = vadd.f32 %v1121, %v1280
          %v1319 = vadd.f32 %v1122, %v1283
          %v1320 = vadd.f32 %v1123, %v1285
          %v1321 = vadd.f32 %v1124, %v1288
          %v1322 = vadd.f32 %v1125, %v1290
          %v1323 = vadd.f32 %v1126, %v1293
          %v1324 = vadd.f32 %v1127, %v1295
          %v1325 = vadd.f32 %v1128, %v1298
          %v1326 = vadd.f32 %v1129, %v1300
          %v1327 = vadd.f32 %v1130, %v1303
          %v1328 = vadd.f32 %v1131, %v1305
          %v1329 = vadd.f32 %v1132, %v1308
          %v1330 = vadd.f32 %v1133, %v1310
          %v1331 = vadd.f32 %v1134, %v1313
          %v1332 = vadd.f32 %v1135, %v1315
          %1333 = vst [vmem:[#allocation5] sm:$0xff] %v1317
          %1334 = vst [vmem:[#allocation5 + $0x8] sm:$0xff] %v1318
          %1335 = vst [vmem:[#allocation5 + $0x10] sm:$0xff] %v1319
          %1336 = vst [vmem:[#allocation5 + $0x18] sm:$0xff] %v1320
          %1337 = vst [vmem:[#allocation5 + $0x20] sm:$0xff] %v1321
          %1338 = vst [vmem:[#allocation5 + $0x28] sm:$0xff] %v1322
          %1339 = vst [vmem:[#allocation5 + $0x30] sm:$0xff] %v1323
          %1340 = vst [vmem:[#allocation5 + $0x38] sm:$0xff] %v1324
          %1341 = vst [vmem:[#allocation5 + $0x40] sm:$0xff] %v1325
          %1342 = vst [vmem:[#allocation5 + $0x48] sm:$0xff] %v1326
          %1343 = vst [vmem:[#allocation5 + $0x50] sm:$0xff] %v1327
          %1344 = vst [vmem:[#allocation5 + $0x58] sm:$0xff] %v1328
          %1345 = vst [vmem:[#allocation5 + $0x60] sm:$0xff] %v1329
          %1346 = vst [vmem:[#allocation5 + $0x68] sm:$0xff] %v1330
          %1347 = vst [vmem:[#allocation5 + $0x70] sm:$0xff] %v1331
          %1348 = vst [vmem:[#allocation5 + $0x78] sm:$0xff] %v1332
        $region116: #{tpu_custom_call.1} parent=59 // pred_fallthru
          _
        %p1349 = pnand %p871, %p869
        %p1350 = pneg %p1349
        // Predicated region
        $region117: #{tpu_custom_call.1} parent=59 // pred_check
          _
        $region118: #{tpu_custom_call.1} parent=59 // pred_check_branch
          %1352 = sbr.rel (%p1349) target = $region120
        $region119: #{tpu_custom_call.1} parent=59 // pred_region
          %v1353 = vld [vmem:[#allocation5] sm:$0xff]
          %v1354 = vld [vmem:[#allocation5 + $0x8] sm:$0xff]
          %v1355 = vld [vmem:[#allocation5 + $0x10] sm:$0xff]
          %v1356 = vld [vmem:[#allocation5 + $0x18] sm:$0xff]
          %v1357 = vld [vmem:[#allocation5 + $0x20] sm:$0xff]
          %v1358 = vld [vmem:[#allocation5 + $0x28] sm:$0xff]
          %v1359 = vld [vmem:[#allocation5 + $0x30] sm:$0xff]
          %v1360 = vld [vmem:[#allocation5 + $0x38] sm:$0xff]
          %v1361 = vld [vmem:[#allocation5 + $0x40] sm:$0xff]
          %v1362 = vld [vmem:[#allocation5 + $0x48] sm:$0xff]
          %v1363 = vld [vmem:[#allocation5 + $0x50] sm:$0xff]
          %v1364 = vld [vmem:[#allocation5 + $0x58] sm:$0xff]
          %v1365 = vld [vmem:[#allocation5 + $0x60] sm:$0xff]
          %v1366 = vld [vmem:[#allocation5 + $0x68] sm:$0xff]
          %v1367 = vld [vmem:[#allocation5 + $0x70] sm:$0xff]
          %v1368 = vld [vmem:[#allocation5 + $0x78] sm:$0xff]
          %v1369 = vpack.c.bf16 %v1354, %v1353
          %v1370 = vpack.c.bf16 %v1356, %v1355
          %v1371 = vpack.c.bf16 %v1358, %v1357
          %v1372 = vpack.c.bf16 %v1360, %v1359
          %v1373 = vpack.c.bf16 %v1362, %v1361
          %v1374 = vpack.c.bf16 %v1364, %v1363
          %v1375 = vpack.c.bf16 %v1366, %v1365
          %v1376 = vpack.c.bf16 %v1368, %v1367
          %v1377 = vld [vmem:[#allocation21] sm:$0xf]
          %v1378 = vld [vmem:[#allocation21 + $0x4] sm:$0xf]
          %v1379 = vld [vmem:[#allocation21 + $0x8] sm:$0xf]
          %v1380 = vld [vmem:[#allocation21 + $0xc] sm:$0xf]
          %v1381 = vld [vmem:[#allocation21 + $0x10] sm:$0xf]
          %v1382 = vld [vmem:[#allocation21 + $0x14] sm:$0xf]
          %v1383 = vld [vmem:[#allocation21 + $0x18] sm:$0xf]
          %v1384 = vld [vmem:[#allocation21 + $0x1c] sm:$0xf]
          %v1385 = vld [vmem:[#allocation21 + $0x20] sm:$0xf]
          %v1386 = vld [vmem:[#allocation21 + $0x24] sm:$0xf]
          %v1387 = vld [vmem:[#allocation21 + $0x28] sm:$0xf]
          %v1388 = vld [vmem:[#allocation21 + $0x2c] sm:$0xf]
          %v1389 = vld [vmem:[#allocation21 + $0x30] sm:$0xf]
          %v1390 = vld [vmem:[#allocation21 + $0x34] sm:$0xf]
          %v1391 = vld [vmem:[#allocation21 + $0x38] sm:$0xf]
          %v1392 = vld [vmem:[#allocation21 + $0x3c] sm:$0xf]
          %v1409 = vunpack.c.l.b16 %v1377
          %v1410 = vunpack.c.l.b16 %v1378
          %v1411 = vunpack.c.l.b16 %v1379
          %v1412 = vunpack.c.l.b16 %v1380
          %v1413 = vunpack.c.l.b16 %v1381
          %v1414 = vunpack.c.l.b16 %v1382
          %v1415 = vunpack.c.l.b16 %v1383
          %v1416 = vunpack.c.l.b16 %v1384
          %v1417 = vunpack.c.l.b16 %v1385
          %v1418 = vunpack.c.l.b16 %v1386
          %v1419 = vunpack.c.l.b16 %v1387
          %v1420 = vunpack.c.l.b16 %v1388
          %v1421 = vunpack.c.l.b16 %v1389
          %v1422 = vunpack.c.l.b16 %v1390
          %v1423 = vunpack.c.l.b16 %v1391
          %v1424 = vunpack.c.l.b16 %v1392
          %v1425 = vpack.c.b16 %v1410, %v1409
          %v1426 = vpack.c.b16 %v1412, %v1411
          %v1427 = vpack.c.b16 %v1414, %v1413
          %v1428 = vpack.c.b16 %v1416, %v1415
          %v1429 = vpack.c.b16 %v1418, %v1417
          %v1430 = vpack.c.b16 %v1420, %v1419
          %v1431 = vpack.c.b16 %v1422, %v1421
          %v1432 = vpack.c.b16 %v1424, %v1423
          %1441 = vmatpush.bf16.msra.mxu0 %v1432
          %1442 = vmatpush.bf16.msra.mxu0 %v1431
          %1443 = vmatpush.bf16.msra.mxu0 %v1430
          %1444 = vmatpush.bf16.msra.mxu0 %v1429
          %1445 = vmatpush.bf16.msra.mxu0 %v1428
          %1446 = vmatpush.bf16.msra.mxu0 %v1427
          %1447 = vmatpush.bf16.msra.mxu0 %v1426
          %1448 = vmatpush.bf16.msra.mxu0 %v1425
          %1449 = vmatmul.bf16.gmra.mxu0 %v1369
          %v1450 = vpop.f32.mrf.mxu0
          %v1451 = vadd.f32 0.0, %v1450
          %v1452 = vpop.f32.mrf.mxu0
          %v1453 = vadd.f32 0.0, %v1452
          %1454 = vmatmul.bf16.gmra.mxu0 %v1370
          %v1455 = vpop.f32.mrf.mxu0
          %v1456 = vadd.f32 0.0, %v1455
          %v1457 = vpop.f32.mrf.mxu0
          %v1458 = vadd.f32 0.0, %v1457
          %1459 = vmatmul.bf16.gmra.mxu0 %v1371
          %v1460 = vpop.f32.mrf.mxu0
          %v1461 = vadd.f32 0.0, %v1460
          %v1462 = vpop.f32.mrf.mxu0
          %v1463 = vadd.f32 0.0, %v1462
          %1464 = vmatmul.bf16.gmra.mxu0 %v1372
          %v1465 = vpop.f32.mrf.mxu0
          %v1466 = vadd.f32 0.0, %v1465
          %v1467 = vpop.f32.mrf.mxu0
          %v1468 = vadd.f32 0.0, %v1467
          %1469 = vmatmul.bf16.gmra.mxu0 %v1373
          %v1470 = vpop.f32.mrf.mxu0
          %v1471 = vadd.f32 0.0, %v1470
          %v1472 = vpop.f32.mrf.mxu0
          %v1473 = vadd.f32 0.0, %v1472
          %1474 = vmatmul.bf16.gmra.mxu0 %v1374
          %v1475 = vpop.f32.mrf.mxu0
          %v1476 = vadd.f32 0.0, %v1475
          %v1477 = vpop.f32.mrf.mxu0
          %v1478 = vadd.f32 0.0, %v1477
          %1479 = vmatmul.bf16.gmra.mxu0 %v1375
          %v1480 = vpop.f32.mrf.mxu0
          %v1481 = vadd.f32 0.0, %v1480
          %v1482 = vpop.f32.mrf.mxu0
          %v1483 = vadd.f32 0.0, %v1482
          %1484 = vmatmul.bf16.gmra.mxu0 %v1376
          %v1485 = vpop.f32.mrf.mxu0
          %v1486 = vadd.f32 0.0, %v1485
          %v1487 = vpop.f32.mrf.mxu0
          %v1488 = vadd.f32 0.0, %v1487
          %1489 = vdwg.mxu0
          %s1490 = scalar_lea.vmem [#allocation2], %s637
          %v1491 = vld [vmem:[%s1490] sm:$0xff]
          %v1492 = vld [vmem:[%s1490 + $0x8] sm:$0xff]
          %v1493 = vld [vmem:[%s1490 + $0x10] sm:$0xff]
          %v1494 = vld [vmem:[%s1490 + $0x18] sm:$0xff]
          %v1495 = vld [vmem:[%s1490 + $0x20] sm:$0xff]
          %v1496 = vld [vmem:[%s1490 + $0x28] sm:$0xff]
          %v1497 = vld [vmem:[%s1490 + $0x30] sm:$0xff]
          %v1498 = vld [vmem:[%s1490 + $0x38] sm:$0xff]
          %v1499 = vld [vmem:[%s1490 + $0x40] sm:$0xff]
          %v1500 = vld [vmem:[%s1490 + $0x48] sm:$0xff]
          %v1501 = vld [vmem:[%s1490 + $0x50] sm:$0xff]
          %v1502 = vld [vmem:[%s1490 + $0x58] sm:$0xff]
          %v1503 = vld [vmem:[%s1490 + $0x60] sm:$0xff]
          %v1504 = vld [vmem:[%s1490 + $0x68] sm:$0xff]
          %v1505 = vld [vmem:[%s1490 + $0x70] sm:$0xff]
          %v1506 = vld [vmem:[%s1490 + $0x78] sm:$0xff]
          %v1507 = vadd.f32 %v1491, %v1451
          %v1508 = vadd.f32 %v1492, %v1453
          %v1509 = vadd.f32 %v1493, %v1456
          %v1510 = vadd.f32 %v1494, %v1458
          %v1511 = vadd.f32 %v1495, %v1461
          %v1512 = vadd.f32 %v1496, %v1463
          %v1513 = vadd.f32 %v1497, %v1466
          %v1514 = vadd.f32 %v1498, %v1468
          %v1515 = vadd.f32 %v1499, %v1471
          %v1516 = vadd.f32 %v1500, %v1473
          %v1517 = vadd.f32 %v1501, %v1476
          %v1518 = vadd.f32 %v1502, %v1478
          %v1519 = vadd.f32 %v1503, %v1481
          %v1520 = vadd.f32 %v1504, %v1483
          %v1521 = vadd.f32 %v1505, %v1486
          %v1522 = vadd.f32 %v1506, %v1488
          %v1523 = vmax.f32 %v1507, 0.0
          %v1524 = vmax.f32 %v1508, 0.0
          %v1525 = vmax.f32 %v1509, 0.0
          %v1526 = vmax.f32 %v1510, 0.0
          %v1527 = vmax.f32 %v1511, 0.0
          %v1528 = vmax.f32 %v1512, 0.0
          %v1529 = vmax.f32 %v1513, 0.0
          %v1530 = vmax.f32 %v1514, 0.0
          %v1531 = vmax.f32 %v1515, 0.0
          %v1532 = vmax.f32 %v1516, 0.0
          %v1533 = vmax.f32 %v1517, 0.0
          %v1534 = vmax.f32 %v1518, 0.0
          %v1535 = vmax.f32 %v1519, 0.0
          %v1536 = vmax.f32 %v1520, 0.0
          %v1537 = vmax.f32 %v1521, 0.0
          %v1538 = vmax.f32 %v1522, 0.0
          %v1539 = vpack.c.bf16 %v1523, %v1523
          %v1540 = vpack.c.bf16 %v1524, %v1524
          %v1541 = vpack.c.bf16 %v1525, %v1525
          %v1542 = vpack.c.bf16 %v1526, %v1526
          %v1543 = vpack.c.bf16 %v1527, %v1527
          %v1544 = vpack.c.bf16 %v1528, %v1528
          %v1545 = vpack.c.bf16 %v1529, %v1529
          %v1546 = vpack.c.bf16 %v1530, %v1530
          %v1547 = vpack.c.bf16 %v1531, %v1531
          %v1548 = vpack.c.bf16 %v1532, %v1532
          %v1549 = vpack.c.bf16 %v1533, %v1533
          %v1550 = vpack.c.bf16 %v1534, %v1534
          %v1551 = vpack.c.bf16 %v1535, %v1535
          %v1552 = vpack.c.bf16 %v1536, %v1536
          %v1553 = vpack.c.bf16 %v1537, %v1537
          %v1554 = vpack.c.bf16 %v1538, %v1538
          %s1555 = sshra.s32 %s637, 3
          %s1556 = sand.u32 %s637, 7
          %s1557 = smul.addr %s1555, 4
          %s1558 = scalar_lea.vmem [#allocation4], %s1557
          %1559 = vst [vmem:[%s1558] sm:$0xf] %v1539
          %1560 = vst [vmem:[%s1558 + $0x4] sm:$0xf] %v1540
          %1561 = vst [vmem:[%s1558 + $0x8] sm:$0xf] %v1541
          %1562 = vst [vmem:[%s1558 + $0xc] sm:$0xf] %v1542
          %1563 = vst [vmem:[%s1558 + $0x10] sm:$0xf] %v1543
          %1564 = vst [vmem:[%s1558 + $0x14] sm:$0xf] %v1544
          %1565 = vst [vmem:[%s1558 + $0x18] sm:$0xf] %v1545
          %1566 = vst [vmem:[%s1558 + $0x1c] sm:$0xf] %v1546
          %1567 = vst [vmem:[%s1558 + $0x20] sm:$0xf] %v1547
          %1568 = vst [vmem:[%s1558 + $0x24] sm:$0xf] %v1548
          %1569 = vst [vmem:[%s1558 + $0x28] sm:$0xf] %v1549
          %1570 = vst [vmem:[%s1558 + $0x2c] sm:$0xf] %v1550
          %1571 = vst [vmem:[%s1558 + $0x30] sm:$0xf] %v1551
          %1572 = vst [vmem:[%s1558 + $0x34] sm:$0xf] %v1552
          %1573 = vst [vmem:[%s1558 + $0x38] sm:$0xf] %v1553
          %1574 = vst [vmem:[%s1558 + $0x3c] sm:$0xf] %v1554
        $region120: #{tpu_custom_call.1} parent=59 // pred_fallthru
          _
        %p1575 = pnand %p1111, %p869
        %p1576 = pneg %p1575
        // Predicated region
        $region121: #{tpu_custom_call.1} parent=59 // pred_check
          _
        $region122: #{tpu_custom_call.1} parent=59 // pred_check_branch
          %1578 = sbr.rel (%p1575) target = $region124
        $region123: #{tpu_custom_call.1} parent=59 // pred_region
          %v1579 = vld [vmem:[#allocation5] sm:$0xff]
          %v1580 = vld [vmem:[#allocation5 + $0x8] sm:$0xff]
          %v1581 = vld [vmem:[#allocation5 + $0x10] sm:$0xff]
          %v1582 = vld [vmem:[#allocation5 + $0x18] sm:$0xff]
          %v1583 = vld [vmem:[#allocation5 + $0x20] sm:$0xff]
          %v1584 = vld [vmem:[#allocation5 + $0x28] sm:$0xff]
          %v1585 = vld [vmem:[#allocation5 + $0x30] sm:$0xff]
          %v1586 = vld [vmem:[#allocation5 + $0x38] sm:$0xff]
          %v1587 = vld [vmem:[#allocation5 + $0x40] sm:$0xff]
          %v1588 = vld [vmem:[#allocation5 + $0x48] sm:$0xff]
          %v1589 = vld [vmem:[#allocation5 + $0x50] sm:$0xff]
          %v1590 = vld [vmem:[#allocation5 + $0x58] sm:$0xff]
          %v1591 = vld [vmem:[#allocation5 + $0x60] sm:$0xff]
          %v1592 = vld [vmem:[#allocation5 + $0x68] sm:$0xff]
          %v1593 = vld [vmem:[#allocation5 + $0x70] sm:$0xff]
          %v1594 = vld [vmem:[#allocation5 + $0x78] sm:$0xff]
          %v1595 = vpack.c.bf16 %v1580, %v1579
          %v1596 = vpack.c.bf16 %v1582, %v1581
          %v1597 = vpack.c.bf16 %v1584, %v1583
          %v1598 = vpack.c.bf16 %v1586, %v1585
          %v1599 = vpack.c.bf16 %v1588, %v1587
          %v1600 = vpack.c.bf16 %v1590, %v1589
          %v1601 = vpack.c.bf16 %v1592, %v1591
          %v1602 = vpack.c.bf16 %v1594, %v1593
          %v1603 = vld [vmem:[#allocation21] sm:$0xf]
          %v1604 = vld [vmem:[#allocation21 + $0x4] sm:$0xf]
          %v1605 = vld [vmem:[#allocation21 + $0x8] sm:$0xf]
          %v1606 = vld [vmem:[#allocation21 + $0xc] sm:$0xf]
          %v1607 = vld [vmem:[#allocation21 + $0x10] sm:$0xf]
          %v1608 = vld [vmem:[#allocation21 + $0x14] sm:$0xf]
          %v1609 = vld [vmem:[#allocation21 + $0x18] sm:$0xf]
          %v1610 = vld [vmem:[#allocation21 + $0x1c] sm:$0xf]
          %v1611 = vld [vmem:[#allocation21 + $0x20] sm:$0xf]
          %v1612 = vld [vmem:[#allocation21 + $0x24] sm:$0xf]
          %v1613 = vld [vmem:[#allocation21 + $0x28] sm:$0xf]
          %v1614 = vld [vmem:[#allocation21 + $0x2c] sm:$0xf]
          %v1615 = vld [vmem:[#allocation21 + $0x30] sm:$0xf]
          %v1616 = vld [vmem:[#allocation21 + $0x34] sm:$0xf]
          %v1617 = vld [vmem:[#allocation21 + $0x38] sm:$0xf]
          %v1618 = vld [vmem:[#allocation21 + $0x3c] sm:$0xf]
          %v1635 = vunpack.c.l.b16 %v1603
          %v1636 = vunpack.c.l.b16 %v1604
          %v1637 = vunpack.c.l.b16 %v1605
          %v1638 = vunpack.c.l.b16 %v1606
          %v1639 = vunpack.c.l.b16 %v1607
          %v1640 = vunpack.c.l.b16 %v1608
          %v1641 = vunpack.c.l.b16 %v1609
          %v1642 = vunpack.c.l.b16 %v1610
          %v1643 = vunpack.c.l.b16 %v1611
          %v1644 = vunpack.c.l.b16 %v1612
          %v1645 = vunpack.c.l.b16 %v1613
          %v1646 = vunpack.c.l.b16 %v1614
          %v1647 = vunpack.c.l.b16 %v1615
          %v1648 = vunpack.c.l.b16 %v1616
          %v1649 = vunpack.c.l.b16 %v1617
          %v1650 = vunpack.c.l.b16 %v1618
          %v1651 = vpack.c.b16 %v1636, %v1635
          %v1652 = vpack.c.b16 %v1638, %v1637
          %v1653 = vpack.c.b16 %v1640, %v1639
          %v1654 = vpack.c.b16 %v1642, %v1641
          %v1655 = vpack.c.b16 %v1644, %v1643
          %v1656 = vpack.c.b16 %v1646, %v1645
          %v1657 = vpack.c.b16 %v1648, %v1647
          %v1658 = vpack.c.b16 %v1650, %v1649
          %1667 = vmatpush.bf16.msra.mxu0 %v1658
          %1668 = vmatpush.bf16.msra.mxu0 %v1657
          %1669 = vmatpush.bf16.msra.mxu0 %v1656
          %1670 = vmatpush.bf16.msra.mxu0 %v1655
          %1671 = vmatpush.bf16.msra.mxu0 %v1654
          %1672 = vmatpush.bf16.msra.mxu0 %v1653
          %1673 = vmatpush.bf16.msra.mxu0 %v1652
          %1674 = vmatpush.bf16.msra.mxu0 %v1651
          %1675 = vmatmul.bf16.gmra.mxu0 %v1595
          %v1676 = vpop.f32.mrf.mxu0
          %v1677 = vadd.f32 0.0, %v1676
          %v1678 = vpop.f32.mrf.mxu0
          %v1679 = vadd.f32 0.0, %v1678
          %1680 = vmatmul.bf16.gmra.mxu0 %v1596
          %v1681 = vpop.f32.mrf.mxu0
          %v1682 = vadd.f32 0.0, %v1681
          %v1683 = vpop.f32.mrf.mxu0
          %v1684 = vadd.f32 0.0, %v1683
          %1685 = vmatmul.bf16.gmra.mxu0 %v1597
          %v1686 = vpop.f32.mrf.mxu0
          %v1687 = vadd.f32 0.0, %v1686
          %v1688 = vpop.f32.mrf.mxu0
          %v1689 = vadd.f32 0.0, %v1688
          %1690 = vmatmul.bf16.gmra.mxu0 %v1598
          %v1691 = vpop.f32.mrf.mxu0
          %v1692 = vadd.f32 0.0, %v1691
          %v1693 = vpop.f32.mrf.mxu0
          %v1694 = vadd.f32 0.0, %v1693
          %1695 = vmatmul.bf16.gmra.mxu0 %v1599
          %v1696 = vpop.f32.mrf.mxu0
          %v1697 = vadd.f32 0.0, %v1696
          %v1698 = vpop.f32.mrf.mxu0
          %v1699 = vadd.f32 0.0, %v1698
          %1700 = vmatmul.bf16.gmra.mxu0 %v1600
          %v1701 = vpop.f32.mrf.mxu0
          %v1702 = vadd.f32 0.0, %v1701
          %v1703 = vpop.f32.mrf.mxu0
          %v1704 = vadd.f32 0.0, %v1703
          %1705 = vmatmul.bf16.gmra.mxu0 %v1601
          %v1706 = vpop.f32.mrf.mxu0
          %v1707 = vadd.f32 0.0, %v1706
          %v1708 = vpop.f32.mrf.mxu0
          %v1709 = vadd.f32 0.0, %v1708
          %1710 = vmatmul.bf16.gmra.mxu0 %v1602
          %v1711 = vpop.f32.mrf.mxu0
          %v1712 = vadd.f32 0.0, %v1711
          %v1713 = vpop.f32.mrf.mxu0
          %v1714 = vadd.f32 0.0, %v1713
          %1715 = vdwg.mxu0
          %s1716 = scalar_lea.vmem [#allocation2], %s637
          %v1717 = vld [vmem:[%s1716] sm:$0xff]
          %v1718 = vld [vmem:[%s1716 + $0x8] sm:$0xff]
          %v1719 = vld [vmem:[%s1716 + $0x10] sm:$0xff]
          %v1720 = vld [vmem:[%s1716 + $0x18] sm:$0xff]
          %v1721 = vld [vmem:[%s1716 + $0x20] sm:$0xff]
          %v1722 = vld [vmem:[%s1716 + $0x28] sm:$0xff]
          %v1723 = vld [vmem:[%s1716 + $0x30] sm:$0xff]
          %v1724 = vld [vmem:[%s1716 + $0x38] sm:$0xff]
          %v1725 = vld [vmem:[%s1716 + $0x40] sm:$0xff]
          %v1726 = vld [vmem:[%s1716 + $0x48] sm:$0xff]
          %v1727 = vld [vmem:[%s1716 + $0x50] sm:$0xff]
          %v1728 = vld [vmem:[%s1716 + $0x58] sm:$0xff]
          %v1729 = vld [vmem:[%s1716 + $0x60] sm:$0xff]
          %v1730 = vld [vmem:[%s1716 + $0x68] sm:$0xff]
          %v1731 = vld [vmem:[%s1716 + $0x70] sm:$0xff]
          %v1732 = vld [vmem:[%s1716 + $0x78] sm:$0xff]
          %v1733 = vadd.f32 %v1717, %v1677
          %v1734 = vadd.f32 %v1718, %v1679
          %v1735 = vadd.f32 %v1719, %v1682
          %v1736 = vadd.f32 %v1720, %v1684
          %v1737 = vadd.f32 %v1721, %v1687
          %v1738 = vadd.f32 %v1722, %v1689
          %v1739 = vadd.f32 %v1723, %v1692
          %v1740 = vadd.f32 %v1724, %v1694
          %v1741 = vadd.f32 %v1725, %v1697
          %v1742 = vadd.f32 %v1726, %v1699
          %v1743 = vadd.f32 %v1727, %v1702
          %v1744 = vadd.f32 %v1728, %v1704
          %v1745 = vadd.f32 %v1729, %v1707
          %v1746 = vadd.f32 %v1730, %v1709
          %v1747 = vadd.f32 %v1731, %v1712
          %v1748 = vadd.f32 %v1732, %v1714
          %v1749 = vmax.f32 %v1733, 0.0
          %v1750 = vmax.f32 %v1734, 0.0
          %v1751 = vmax.f32 %v1735, 0.0
          %v1752 = vmax.f32 %v1736, 0.0
          %v1753 = vmax.f32 %v1737, 0.0
          %v1754 = vmax.f32 %v1738, 0.0
          %v1755 = vmax.f32 %v1739, 0.0
          %v1756 = vmax.f32 %v1740, 0.0
          %v1757 = vmax.f32 %v1741, 0.0
          %v1758 = vmax.f32 %v1742, 0.0
          %v1759 = vmax.f32 %v1743, 0.0
          %v1760 = vmax.f32 %v1744, 0.0
          %v1761 = vmax.f32 %v1745, 0.0
          %v1762 = vmax.f32 %v1746, 0.0
          %v1763 = vmax.f32 %v1747, 0.0
          %v1764 = vmax.f32 %v1748, 0.0
          %v1765 = vpack.c.bf16 %v1749, %v1749
          %v1766 = vpack.c.bf16 %v1750, %v1750
          %v1767 = vpack.c.bf16 %v1751, %v1751
          %v1768 = vpack.c.bf16 %v1752, %v1752
          %v1769 = vpack.c.bf16 %v1753, %v1753
          %v1770 = vpack.c.bf16 %v1754, %v1754
          %v1771 = vpack.c.bf16 %v1755, %v1755
          %v1772 = vpack.c.bf16 %v1756, %v1756
          %v1773 = vpack.c.bf16 %v1757, %v1757
          %v1774 = vpack.c.bf16 %v1758, %v1758
          %v1775 = vpack.c.bf16 %v1759, %v1759
          %v1776 = vpack.c.bf16 %v1760, %v1760
          %v1777 = vpack.c.bf16 %v1761, %v1761
          %v1778 = vpack.c.bf16 %v1762, %v1762
          %v1779 = vpack.c.bf16 %v1763, %v1763
          %v1780 = vpack.c.bf16 %v1764, %v1764
          %s1781 = sshra.s32 %s637, 3
          %s1782 = sand.u32 %s637, 7
          %s1783 = smul.addr %s1781, 4
          %s1784 = scalar_lea.vmem [#allocation3], %s1783
          %1785 = vst [vmem:[%s1784] sm:$0xf] %v1765
          %1786 = vst [vmem:[%s1784 + $0x4] sm:$0xf] %v1766
          %1787 = vst [vmem:[%s1784 + $0x8] sm:$0xf] %v1767
          %1788 = vst [vmem:[%s1784 + $0xc] sm:$0xf] %v1768
          %1789 = vst [vmem:[%s1784 + $0x10] sm:$0xf] %v1769
          %1790 = vst [vmem:[%s1784 + $0x14] sm:$0xf] %v1770
          %1791 = vst [vmem:[%s1784 + $0x18] sm:$0xf] %v1771
          %1792 = vst [vmem:[%s1784 + $0x1c] sm:$0xf] %v1772
          %1793 = vst [vmem:[%s1784 + $0x20] sm:$0xf] %v1773
          %1794 = vst [vmem:[%s1784 + $0x24] sm:$0xf] %v1774
          %1795 = vst [vmem:[%s1784 + $0x28] sm:$0xf] %v1775
          %1796 = vst [vmem:[%s1784 + $0x2c] sm:$0xf] %v1776
          %1797 = vst [vmem:[%s1784 + $0x30] sm:$0xf] %v1777
          %1798 = vst [vmem:[%s1784 + $0x34] sm:$0xf] %v1778
          %1799 = vst [vmem:[%s1784 + $0x38] sm:$0xf] %v1779
          %1800 = vst [vmem:[%s1784 + $0x3c] sm:$0xf] %v1780
        $region124: #{tpu_custom_call.1} parent=59 // pred_fallthru
          _
        %p1801 = scmp.eq.s32.totalorder %s51, 3
        %p1802 = pnand %p1801, %p646
        %p1803 = pneg %p1802
        // Predicated region
        $region125: #{tpu_custom_call.1} parent=59 // pred_check
          _
        $region126: #{tpu_custom_call.1} parent=59 // pred_check_branch
          %1805 = sbr.rel (%p1802) target = $region128
        $region127: #{tpu_custom_call.1} parent=59 // pred_region
          %v1806 = vld [vmem:[#allocation6] sm:$0xff]
          %v1807 = vld [vmem:[#allocation6 + $0x8] sm:$0xff]
          %v1808 = vld [vmem:[#allocation6 + $0x10] sm:$0xff]
          %v1809 = vld [vmem:[#allocation6 + $0x18] sm:$0xff]
          %v1810 = vld [vmem:[#allocation6 + $0x20] sm:$0xff]
          %v1811 = vld [vmem:[#allocation6 + $0x28] sm:$0xff]
          %v1812 = vld [vmem:[#allocation6 + $0x30] sm:$0xff]
          %v1813 = vld [vmem:[#allocation6 + $0x38] sm:$0xff]
          %v1814 = vld [vmem:[#allocation6 + $0x40] sm:$0xff]
          %v1815 = vld [vmem:[#allocation6 + $0x48] sm:$0xff]
          %v1816 = vld [vmem:[#allocation6 + $0x50] sm:$0xff]
          %v1817 = vld [vmem:[#allocation6 + $0x58] sm:$0xff]
          %v1818 = vld [vmem:[%s549] sm:$0xf]
          %v1819 = vld [vmem:[%s549 + $0x4] sm:$0xf]
          %v1820 = vld [vmem:[%s549 + $0x8] sm:$0xf]
          %v1821 = vld [vmem:[%s549 + $0xc] sm:$0xf]
          %v1822 = vld [vmem:[%s549 + $0x10] sm:$0xf]
          %v1823 = vld [vmem:[%s549 + $0x14] sm:$0xf]
          %v1824 = vld [vmem:[%s549 + $0x18] sm:$0xf]
          %v1825 = vld [vmem:[%s549 + $0x1c] sm:$0xf]
          %v1826 = vld [vmem:[%s549 + $0x20] sm:$0xf]
          %v1827 = vld [vmem:[%s549 + $0x24] sm:$0xf]
          %v1828 = vld [vmem:[%s549 + $0x28] sm:$0xf]
          %v1829 = vld [vmem:[%s549 + $0x2c] sm:$0xf]
          %s1830 = sshra.s32 %s637, 3
          %s1831 = sand.u32 %s637, 7
          %s1832 = smul.addr %s1830, 4
          %s1833 = scalar_lea.vmem [#allocation3], %s1832
          %v1834 = vld [vmem:[%s1833] sm:$0xf]
          %v1835 = vld [vmem:[%s1833 + $0x4] sm:$0xf]
          %v1836 = vld [vmem:[%s1833 + $0x8] sm:$0xf]
          %v1837 = vld [vmem:[%s1833 + $0xc] sm:$0xf]
          %v1838 = vld [vmem:[%s1833 + $0x10] sm:$0xf]
          %v1839 = vld [vmem:[%s1833 + $0x14] sm:$0xf]
          %v1840 = vld [vmem:[%s1833 + $0x18] sm:$0xf]
          %v1841 = vld [vmem:[%s1833 + $0x1c] sm:$0xf]
          %v1842 = vld [vmem:[%s1833 + $0x20] sm:$0xf]
          %v1843 = vld [vmem:[%s1833 + $0x24] sm:$0xf]
          %v1844 = vld [vmem:[%s1833 + $0x28] sm:$0xf]
          %v1845 = vld [vmem:[%s1833 + $0x2c] sm:$0xf]
          %v1846 = vld [vmem:[%s1833 + $0x30] sm:$0xf]
          %v1847 = vld [vmem:[%s1833 + $0x34] sm:$0xf]
          %v1848 = vld [vmem:[%s1833 + $0x38] sm:$0xf]
          %v1849 = vld [vmem:[%s1833 + $0x3c] sm:$0xf]
          %v1862 = vunpack.c.l.b16 %v1818
          %v1863 = vunpack.c.l.b16 %v1819
          %v1864 = vunpack.c.l.b16 %v1820
          %v1865 = vunpack.c.l.b16 %v1821
          %v1866 = vunpack.c.l.b16 %v1822
          %v1867 = vunpack.c.l.b16 %v1823
          %v1868 = vunpack.c.l.b16 %v1824
          %v1869 = vunpack.c.l.b16 %v1825
          %v1870 = vunpack.c.l.b16 %v1826
          %v1871 = vunpack.c.l.b16 %v1827
          %v1872 = vunpack.c.l.b16 %v1828
          %v1873 = vunpack.c.l.b16 %v1829
          %v1874 = vpack.c.b16 %v1863, %v1862
          %v1875 = vpack.c.b16 %v1865, %v1864
          %v1876 = vpack.c.b16 %v1867, %v1866
          %v1877 = vpack.c.b16 %v1869, %v1868
          %v1878 = vpack.c.b16 %v1871, %v1870
          %v1879 = vpack.c.b16 %v1873, %v1872
          %v1902 = vunpack.c.l.b16 %v1834
          %v1903 = vunpack.c.l.b16 %v1835
          %v1904 = vunpack.c.l.b16 %v1836
          %v1905 = vunpack.c.l.b16 %v1837
          %v1906 = vunpack.c.l.b16 %v1838
          %v1907 = vunpack.c.l.b16 %v1839
          %v1908 = vunpack.c.l.b16 %v1840
          %v1909 = vunpack.c.l.b16 %v1841
          %v1910 = vunpack.c.l.b16 %v1842
          %v1911 = vunpack.c.l.b16 %v1843
          %v1912 = vunpack.c.l.b16 %v1844
          %v1913 = vunpack.c.l.b16 %v1845
          %v1914 = vunpack.c.l.b16 %v1846
          %v1915 = vunpack.c.l.b16 %v1847
          %v1916 = vunpack.c.l.b16 %v1848
          %v1917 = vunpack.c.l.b16 %v1849
          %v1918 = vpack.c.b16 %v1903, %v1902
          %v1919 = vpack.c.b16 %v1905, %v1904
          %v1920 = vpack.c.b16 %v1907, %v1906
          %v1921 = vpack.c.b16 %v1909, %v1908
          %v1922 = vpack.c.b16 %v1911, %v1910
          %v1923 = vpack.c.b16 %v1913, %v1912
          %v1924 = vpack.c.b16 %v1915, %v1914
          %v1925 = vpack.c.b16 %v1917, %v1916
          %1934 = vmatpush.bf16.msra.mxu0 %v1925
          %1935 = vmatpush.bf16.msra.mxu0 %v1924
          %1936 = vmatpush.bf16.msra.mxu0 %v1923
          %1937 = vmatpush.bf16.msra.mxu0 %v1922
          %1938 = vmatpush.bf16.msra.mxu0 %v1921
          %1939 = vmatpush.bf16.msra.mxu0 %v1920
          %1940 = vmatpush.bf16.msra.mxu0 %v1919
          %1941 = vmatpush.bf16.msra.mxu0 %v1918
          %1942 = vmatmul.bf16.gmra.mxu0 %v1874
          %v1943 = vpop.f32.mrf.mxu0
          %v1944 = vadd.f32 0.0, %v1943
          %v1945 = vpop.f32.mrf.mxu0
          %v1946 = vadd.f32 0.0, %v1945
          %1947 = vmatmul.bf16.gmra.mxu0 %v1875
          %v1948 = vpop.f32.mrf.mxu0
          %v1949 = vadd.f32 0.0, %v1948
          %v1950 = vpop.f32.mrf.mxu0
          %v1951 = vadd.f32 0.0, %v1950
          %1952 = vmatmul.bf16.gmra.mxu0 %v1876
          %v1953 = vpop.f32.mrf.mxu0
          %v1954 = vadd.f32 0.0, %v1953
          %v1955 = vpop.f32.mrf.mxu0
          %v1956 = vadd.f32 0.0, %v1955
          %1957 = vmatmul.bf16.gmra.mxu0 %v1877
          %v1958 = vpop.f32.mrf.mxu0
          %v1959 = vadd.f32 0.0, %v1958
          %v1960 = vpop.f32.mrf.mxu0
          %v1961 = vadd.f32 0.0, %v1960
          %1962 = vmatmul.bf16.gmra.mxu0 %v1878
          %v1963 = vpop.f32.mrf.mxu0
          %v1964 = vadd.f32 0.0, %v1963
          %v1965 = vpop.f32.mrf.mxu0
          %v1966 = vadd.f32 0.0, %v1965
          %1967 = vmatmul.bf16.gmra.mxu0 %v1879
          %v1968 = vpop.f32.mrf.mxu0
          %v1969 = vadd.f32 0.0, %v1968
          %v1970 = vpop.f32.mrf.mxu0
          %v1971 = vadd.f32 0.0, %v1970
          %1972 = vdwg.mxu0
          %v1973 = vadd.f32 %v1806, %v1944
          %v1974 = vadd.f32 %v1807, %v1946
          %v1975 = vadd.f32 %v1808, %v1949
          %v1976 = vadd.f32 %v1809, %v1951
          %v1977 = vadd.f32 %v1810, %v1954
          %v1978 = vadd.f32 %v1811, %v1956
          %v1979 = vadd.f32 %v1812, %v1959
          %v1980 = vadd.f32 %v1813, %v1961
          %v1981 = vadd.f32 %v1814, %v1964
          %v1982 = vadd.f32 %v1815, %v1966
          %v1983 = vadd.f32 %v1816, %v1969
          %v1984 = vadd.f32 %v1817, %v1971
          %1985 = vst [vmem:[#allocation6] sm:$0xff] %v1973
          %1986 = vst [vmem:[#allocation6 + $0x8] sm:$0xff] %v1974
          %1987 = vst [vmem:[#allocation6 + $0x10] sm:$0xff] %v1975
          %1988 = vst [vmem:[#allocation6 + $0x18] sm:$0xff] %v1976
          %1989 = vst [vmem:[#allocation6 + $0x20] sm:$0xff] %v1977
          %1990 = vst [vmem:[#allocation6 + $0x28] sm:$0xff] %v1978
          %1991 = vst [vmem:[#allocation6 + $0x30] sm:$0xff] %v1979
          %1992 = vst [vmem:[#allocation6 + $0x38] sm:$0xff] %v1980
          %1993 = vst [vmem:[#allocation6 + $0x40] sm:$0xff] %v1981
          %1994 = vst [vmem:[#allocation6 + $0x48] sm:$0xff] %v1982
          %1995 = vst [vmem:[#allocation6 + $0x50] sm:$0xff] %v1983
          %1996 = vst [vmem:[#allocation6 + $0x58] sm:$0xff] %v1984
        $region128: #{tpu_custom_call.1} parent=59 // pred_fallthru
          _
        %p1997 = scmp.eq.s32.totalorder %s52, 1
        %p1998 = pnand %p1801, %p1997
        %p1999 = pneg %p1998
        %p2000 = pnand %p1999, %p869
        %p2001 = pneg %p2000
        // Predicated region
        $region129: #{tpu_custom_call.1} parent=59 // pred_check
          _
        $region130: #{tpu_custom_call.1} parent=59 // pred_check_branch
          %2003 = sbr.rel (%p2000) target = $region132
        $region131: #{tpu_custom_call.1} parent=59 // pred_region
          %v2004 = vld [vmem:[#allocation16] sm:$0xff]
          %v2005 = vld [vmem:[#allocation16 + $0x8] sm:$0xff]
          %v2006 = vld [vmem:[#allocation16 + $0x10] sm:$0xff]
          %v2007 = vld [vmem:[#allocation16 + $0x18] sm:$0xff]
          %v2008 = vld [vmem:[#allocation16 + $0x20] sm:$0xff]
          %v2009 = vld [vmem:[#allocation16 + $0x28] sm:$0xff]
          %v2010 = vld [vmem:[#allocation16 + $0x30] sm:$0xff]
          %v2011 = vld [vmem:[#allocation16 + $0x38] sm:$0xff]
          %v2012 = vld [vmem:[#allocation16 + $0x40] sm:$0xff]
          %v2013 = vld [vmem:[#allocation16 + $0x48] sm:$0xff]
          %v2014 = vld [vmem:[#allocation16 + $0x50] sm:$0xff]
          %v2015 = vld [vmem:[#allocation16 + $0x58] sm:$0xff]
          %v2016 = vld [vmem:[#allocation22] sm:$0xff]
          %v2017 = vld [vmem:[#allocation22 + $0x8] sm:$0xff]
          %v2018 = vld [vmem:[#allocation22 + $0x10] sm:$0xff]
          %v2019 = vld [vmem:[#allocation22 + $0x18] sm:$0xff]
          %v2020 = vld [vmem:[#allocation22 + $0x20] sm:$0xff]
          %v2021 = vld [vmem:[#allocation22 + $0x28] sm:$0xff]
          %v2022 = vld [vmem:[#allocation22 + $0x30] sm:$0xff]
          %v2023 = vld [vmem:[#allocation22 + $0x38] sm:$0xff]
          %v2024 = vld [vmem:[#allocation22 + $0x40] sm:$0xff]
          %v2025 = vld [vmem:[#allocation22 + $0x48] sm:$0xff]
          %v2026 = vld [vmem:[#allocation22 + $0x50] sm:$0xff]
          %v2027 = vld [vmem:[#allocation22 + $0x58] sm:$0xff]
          %v2028 = vld [vmem:[#allocation22 + $0x60] sm:$0xff]
          %v2029 = vld [vmem:[#allocation22 + $0x68] sm:$0xff]
          %v2030 = vld [vmem:[#allocation22 + $0x70] sm:$0xff]
          %v2031 = vld [vmem:[#allocation22 + $0x78] sm:$0xff]
          %v2032 = vld [vmem:[#allocation6] sm:$0xff]
          %v2033 = vld [vmem:[#allocation6 + $0x8] sm:$0xff]
          %v2034 = vld [vmem:[#allocation6 + $0x10] sm:$0xff]
          %v2035 = vld [vmem:[#allocation6 + $0x18] sm:$0xff]
          %v2036 = vld [vmem:[#allocation6 + $0x20] sm:$0xff]
          %v2037 = vld [vmem:[#allocation6 + $0x28] sm:$0xff]
          %v2038 = vld [vmem:[#allocation6 + $0x30] sm:$0xff]
          %v2039 = vld [vmem:[#allocation6 + $0x38] sm:$0xff]
          %v2040 = vld [vmem:[#allocation6 + $0x40] sm:$0xff]
          %v2041 = vld [vmem:[#allocation6 + $0x48] sm:$0xff]
          %v2042 = vld [vmem:[#allocation6 + $0x50] sm:$0xff]
          %v2043 = vld [vmem:[#allocation6 + $0x58] sm:$0xff]
          %v2044 = vpack.c.bf16 %v2033, %v2032
          %v2045 = vpack.c.bf16 %v2035, %v2034
          %v2046 = vpack.c.bf16 %v2037, %v2036
          %v2047 = vpack.c.bf16 %v2039, %v2038
          %v2048 = vpack.c.bf16 %v2041, %v2040
          %v2049 = vpack.c.bf16 %v2043, %v2042
          %v2050 = vld [vmem:[#allocation24] sm:$0xf]
          %v2051 = vld [vmem:[#allocation24 + $0x4] sm:$0xf]
          %v2052 = vld [vmem:[#allocation24 + $0x8] sm:$0xf]
          %v2053 = vld [vmem:[#allocation24 + $0xc] sm:$0xf]
          %v2054 = vld [vmem:[#allocation24 + $0x10] sm:$0xf]
          %v2055 = vld [vmem:[#allocation24 + $0x14] sm:$0xf]
          %v2056 = vld [vmem:[#allocation24 + $0x18] sm:$0xf]
          %v2057 = vld [vmem:[#allocation24 + $0x1c] sm:$0xf]
          %v2058 = vld [vmem:[#allocation24 + $0x20] sm:$0xf]
          %v2059 = vld [vmem:[#allocation24 + $0x24] sm:$0xf]
          %v2060 = vld [vmem:[#allocation24 + $0x28] sm:$0xf]
          %v2061 = vld [vmem:[#allocation24 + $0x2c] sm:$0xf]
          %v2062 = vld [vmem:[#allocation24 + $0x30] sm:$0xf]
          %v2063 = vld [vmem:[#allocation24 + $0x34] sm:$0xf]
          %v2064 = vld [vmem:[#allocation24 + $0x38] sm:$0xf]
          %v2065 = vld [vmem:[#allocation24 + $0x3c] sm:$0xf]
          %v2082 = vunpack.c.l.b16 %v2050
          %v2083 = vunpack.c.l.b16 %v2051
          %v2084 = vunpack.c.l.b16 %v2052
          %v2085 = vunpack.c.l.b16 %v2053
          %v2086 = vunpack.c.l.b16 %v2054
          %v2087 = vunpack.c.l.b16 %v2055
          %v2088 = vunpack.c.l.b16 %v2056
          %v2089 = vunpack.c.l.b16 %v2057
          %v2090 = vunpack.c.l.b16 %v2058
          %v2091 = vunpack.c.l.b16 %v2059
          %v2092 = vunpack.c.l.b16 %v2060
          %v2093 = vunpack.c.l.b16 %v2061
          %v2094 = vunpack.c.l.b16 %v2062
          %v2095 = vunpack.c.l.b16 %v2063
          %v2096 = vunpack.c.l.b16 %v2064
          %v2097 = vunpack.c.l.b16 %v2065
          %v2098 = vpack.c.b16 %v2083, %v2082
          %v2099 = vpack.c.b16 %v2085, %v2084
          %v2100 = vpack.c.b16 %v2087, %v2086
          %v2101 = vpack.c.b16 %v2089, %v2088
          %v2102 = vpack.c.b16 %v2091, %v2090
          %v2103 = vpack.c.b16 %v2093, %v2092
          %v2104 = vpack.c.b16 %v2095, %v2094
          %v2105 = vpack.c.b16 %v2097, %v2096
          %2114 = vmatpush.bf16.msra.mxu0 %v2105
          %2115 = vmatpush.bf16.msra.mxu0 %v2104
          %2116 = vmatpush.bf16.msra.mxu0 %v2103
          %2117 = vmatpush.bf16.msra.mxu0 %v2102
          %2118 = vmatpush.bf16.msra.mxu0 %v2101
          %2119 = vmatpush.bf16.msra.mxu0 %v2100
          %2120 = vmatpush.bf16.msra.mxu0 %v2099
          %2121 = vmatpush.bf16.msra.mxu0 %v2098
          %2122 = vmatmul.bf16.gmra.mxu0 %v2044
          %v2123 = vpop.f32.mrf.mxu0
          %v2124 = vadd.f32 0.0, %v2123
          %v2125 = vpop.f32.mrf.mxu0
          %v2126 = vadd.f32 0.0, %v2125
          %2127 = vmatmul.bf16.gmra.mxu0 %v2045
          %v2128 = vpop.f32.mrf.mxu0
          %v2129 = vadd.f32 0.0, %v2128
          %v2130 = vpop.f32.mrf.mxu0
          %v2131 = vadd.f32 0.0, %v2130
          %2132 = vmatmul.bf16.gmra.mxu0 %v2046
          %v2133 = vpop.f32.mrf.mxu0
          %v2134 = vadd.f32 0.0, %v2133
          %v2135 = vpop.f32.mrf.mxu0
          %v2136 = vadd.f32 0.0, %v2135
          %2137 = vmatmul.bf16.gmra.mxu0 %v2047
          %v2138 = vpop.f32.mrf.mxu0
          %v2139 = vadd.f32 0.0, %v2138
          %v2140 = vpop.f32.mrf.mxu0
          %v2141 = vadd.f32 0.0, %v2140
          %2142 = vmatmul.bf16.gmra.mxu0 %v2048
          %v2143 = vpop.f32.mrf.mxu0
          %v2144 = vadd.f32 0.0, %v2143
          %v2145 = vpop.f32.mrf.mxu0
          %v2146 = vadd.f32 0.0, %v2145
          %2147 = vmatmul.bf16.gmra.mxu0 %v2049
          %v2148 = vpop.f32.mrf.mxu0
          %v2149 = vadd.f32 0.0, %v2148
          %v2150 = vpop.f32.mrf.mxu0
          %v2151 = vadd.f32 0.0, %v2150
          %2152 = vdwg.mxu0
          %2153 = vmatpush.msra.mxu0 %v2031
          %2154 = vmatpush.msra.mxu0 %v2030
          %2155 = vmatpush.msra.mxu0 %v2029
          %2156 = vmatpush.msra.mxu0 %v2028
          %2157 = vmatpush.msra.mxu0 %v2027
          %2158 = vmatpush.msra.mxu0 %v2026
          %2159 = vmatpush.msra.mxu0 %v2025
          %2160 = vmatpush.msra.mxu0 %v2024
          %2161 = vmatpush.msra.mxu0 %v2023
          %2162 = vmatpush.msra.mxu0 %v2022
          %2163 = vmatpush.msra.mxu0 %v2021
          %2164 = vmatpush.msra.mxu0 %v2020
          %2165 = vmatpush.msra.mxu0 %v2019
          %2166 = vmatpush.msra.mxu0 %v2018
          %2167 = vmatpush.msra.mxu0 %v2017
          %2168 = vmatpush.msra.mxu0 %v2016
          %2169 = vmatmul.f32.gmra.mxu0 %v2004
          %v2170 = vpop.f32.mrf.mxu0
          %v2171 = vadd.f32 %v2124, %v2170
          %2172 = vmatmul.f32.gmra.mxu0 %v2005
          %v2173 = vpop.f32.mrf.mxu0
          %v2174 = vadd.f32 %v2126, %v2173
          %2175 = vmatmul.f32.gmra.mxu0 %v2006
          %v2176 = vpop.f32.mrf.mxu0
          %v2177 = vadd.f32 %v2129, %v2176
          %2178 = vmatmul.f32.gmra.mxu0 %v2007
          %v2179 = vpop.f32.mrf.mxu0
          %v2180 = vadd.f32 %v2131, %v2179
          %2181 = vmatmul.f32.gmra.mxu0 %v2008
          %v2182 = vpop.f32.mrf.mxu0
          %v2183 = vadd.f32 %v2134, %v2182
          %2184 = vmatmul.f32.gmra.mxu0 %v2009
          %v2185 = vpop.f32.mrf.mxu0
          %v2186 = vadd.f32 %v2136, %v2185
          %2187 = vmatmul.f32.gmra.mxu0 %v2010
          %v2188 = vpop.f32.mrf.mxu0
          %v2189 = vadd.f32 %v2139, %v2188
          %2190 = vmatmul.f32.gmra.mxu0 %v2011
          %v2191 = vpop.f32.mrf.mxu0
          %v2192 = vadd.f32 %v2141, %v2191
          %2193 = vmatmul.f32.gmra.mxu0 %v2012
          %v2194 = vpop.f32.mrf.mxu0
          %v2195 = vadd.f32 %v2144, %v2194
          %2196 = vmatmul.f32.gmra.mxu0 %v2013
          %v2197 = vpop.f32.mrf.mxu0
          %v2198 = vadd.f32 %v2146, %v2197
          %2199 = vmatmul.f32.gmra.mxu0 %v2014
          %v2200 = vpop.f32.mrf.mxu0
          %v2201 = vadd.f32 %v2149, %v2200
          %2202 = vmatmul.f32.gmra.mxu0 %v2015
          %v2203 = vpop.f32.mrf.mxu0
          %v2204 = vadd.f32 %v2151, %v2203
          %2205 = vdwg.mxu0
          %v2206 = vld [vmem:[%s11] sm:$0x1]
          %v2208 = vperm.slane %v2206, 0
          %v2210 = vadd.f32 %v2171, %v2208
          %v2211 = vadd.f32 %v2174, %v2208
          %v2212 = vadd.f32 %v2177, %v2208
          %v2213 = vadd.f32 %v2180, %v2208
          %v2214 = vadd.f32 %v2183, %v2208
          %v2215 = vadd.f32 %v2186, %v2208
          %v2216 = vadd.f32 %v2189, %v2208
          %v2217 = vadd.f32 %v2192, %v2208
          %v2218 = vadd.f32 %v2195, %v2208
          %v2219 = vadd.f32 %v2198, %v2208
          %v2220 = vadd.f32 %v2201, %v2208
          %v2221 = vadd.f32 %v2204, %v2208
          %v2222 = vmax.f32 %v2210, 0.0
          %v2223 = vmax.f32 %v2211, 0.0
          %v2224 = vmax.f32 %v2212, 0.0
          %v2225 = vmax.f32 %v2213, 0.0
          %v2226 = vmax.f32 %v2214, 0.0
          %v2227 = vmax.f32 %v2215, 0.0
          %v2228 = vmax.f32 %v2216, 0.0
          %v2229 = vmax.f32 %v2217, 0.0
          %v2230 = vmax.f32 %v2218, 0.0
          %v2231 = vmax.f32 %v2219, 0.0
          %v2232 = vmax.f32 %v2220, 0.0
          %v2233 = vmax.f32 %v2221, 0.0
          %v2234 = vld [vmem:[#allocation18] sm:$0xff]
          %vm2235 = vcmask 785408
          %v2237 = vsel %vm2235, %v2234, 0
          %2239 = vmatpush.msra.mxu0 0.0
          %2240 = vmatpush.msra.mxu0 0.0
          %2241 = vmatpush.msra.mxu0 0.0
          %2242 = vmatpush.msra.mxu0 0.0
          %2243 = vmatpush.msra.mxu0 %v2233
          %2244 = vmatpush.msra.mxu0 %v2232
          %2245 = vmatpush.msra.mxu0 %v2231
          %2246 = vmatpush.msra.mxu0 %v2230
          %2247 = vmatpush.msra.mxu0 %v2229
          %2248 = vmatpush.msra.mxu0 %v2228
          %2249 = vmatpush.msra.mxu0 %v2227
          %2250 = vmatpush.msra.mxu0 %v2226
          %2251 = vmatpush.msra.mxu0 %v2225
          %2252 = vmatpush.msra.mxu0 %v2224
          %2253 = vmatpush.msra.mxu0 %v2223
          %2254 = vmatpush.msra.mxu0 %v2222
          %2255 = vmatmul.f32.gmra.mxu0 %v2237
          %v2256 = vpop.f32.mrf.mxu0
          %v2257 = vadd.f32 0.0, %v2256
          %2258 = vdwg.mxu0
          %2259 = vst [vmem:[#allocation25] sm:$0xff] %v2257
        $region132: #{tpu_custom_call.1} parent=59 // pred_fallthru
          _
        // Predicated region
        $region133: #{tpu_custom_call.1} parent=59 // pred_check
          %p2260 = pneg %p331
        $region134: #{tpu_custom_call.1} parent=59 // pred_check_branch
          %2262 = sbr.rel (%p2260) target = $region136
        $region135: #{tpu_custom_call.1} parent=59 // pred_region
          %2264 = vsyncadd [#allocation12], 0
          %s2266 = sshll.u32 [#allocation25], 4
          %s2267 = int_to_ptr.vmem [resolvable:$true] %s2266
          %s2268 = sshll.u32 %s12, 4
          %s2269 = int_to_ptr.hbm [resolvable:$true] %s2268
          %2271 = dma.vmem_to_hbm [thread:$0]  %s2267, 128, %s2269, [#allocation12]
        $region136: #{tpu_custom_call.1} parent=59 // pred_fallthru
          _
        // Predicated region
        $region137: #{tpu_custom_call.1} parent=59 // pred_check
          %p2272 = pneg %p331
        $region138: #{tpu_custom_call.1} parent=59 // pred_check_branch
          %2274 = sbr.rel (%p2272) target = $region140
        $region139: #{tpu_custom_call.1} parent=59 // pred_region
          %2276 = dma.done [#allocation12], 128
        $region140: #{tpu_custom_call.1} parent=59 // pred_fallthru
          _
      $region60: #{tpu_custom_call.1} parent=5 // pred_fallthru
        _
      %p2277 = scmp.le.s32.totalorder 2, %s41
      // Predicated region
      $region141: #{tpu_custom_call.1} parent=5 // pred_check
        %p2278 = pneg %p2277
      $region142: #{tpu_custom_call.1} parent=5 // pred_check_branch
        %2280 = sbr.rel (%p2278) target = $region144
      $region143: #{tpu_custom_call.1} parent=5 // pred_region
        %s2281 = ssub.s32 %s41, 2
      $region144: #{tpu_custom_call.1} parent=5 // pred_fallthru
        _
    $region6: #{tpu_custom_call.1} parent=1 // loop_footer
      %s45 = sadd.s32 1, %s41
    $region7: #{tpu_custom_call.1} parent=1 // loop_footer_branch
      %40 = sbr.rel target = $region3
    $region8: #{tpu_custom_call.1} parent=1 // loop_exit
      _
    %2282 = vsyncpa [#allocation11], 1
    %s2283 = scalar_lea.sflag [#allocation11], 1
    %2284 = vsyncpa %s2283, 1
    %2285 = vsyncpa [#allocation14], 1
    %s2286 = scalar_lea.sflag [#allocation14], 1
    %2287 = vsyncpa %s2286, 1
    %2288 = vsyncpa [#allocation17], 1
    %2289 = vsyncpa [#allocation20], 1
    %2290 = vsyncpa [#allocation23], 1
    %2291 = vsyncpa [#allocation12], 1
    %s2292 = scalar_lea.sflag [#allocation12], 1
    %2293 = vsyncpa %s2292, 1

</llo_original>
